<compile_context>
chip_gen: v5e
topology: v5e:2x2
jax: 0.10.0
libtpu: 0.0.40
codegen_flags: <defaults>
</compile_context>

<pallas_src>
import jax
import jax.numpy as jnp
from jax.experimental import pallas as pl
from jax.experimental.pallas import tpu as pltpu

LANES = 128
# Set to jnp.bfloat16 on v6e/v7x for the bf16 MXU fast path (accumulation stays f32).
# Default f32 keeps exact numerical parity with the PyTorch module.
COMPUTE_DTYPE = jnp.float32


# ----------------------------------------------------------------------------
# Pallas kernels
# ----------------------------------------------------------------------------
def _conv_relu_pool_kernel(p_ref, w_ref, b_ref, o_ref):
    """Fused conv(+bias) -> ReLU -> 2x2 max-pool for one image.

    p_ref: (1, 4, S, Kp)  four pool-tap im2col matrices (rows = pooled pixels)
    w_ref: (Kp, 128)      conv weights, K and Cout zero-padded to lane-dense sizes
    b_ref: (1, 128)       bias, zero-padded
    o_ref: (1, S, 128)    pooled activation, channels on the lane-dense last dim
    """
    w = w_ref[...]
    b = b_ref[...]
    out = None
    for t in range(4):  # the four 2x2-pool taps, unrolled
        acc = jnp.dot(p_ref[0, t], w, preferred_element_type=jnp.float32)
        acc = jnp.maximum(acc + b, 0.0)
        out = acc if out is None else jnp.maximum(out, acc)
    o_ref[0] = out.astype(o_ref.dtype)


def _fc_fused_kernel(x_ref, w1_ref, b1_ref, w2_ref, b2_ref, w3_ref, b3_ref, o_ref):
    """fc1+ReLU -> fc2+ReLU -> fc3 in one kernel; all widths padded to 128 lanes."""
    h = jnp.dot(x_ref[...], w1_ref[...], preferred_element_type=jnp.float32) + b1_ref[...]
    h = jnp.maximum(h, 0.0).astype(w2_ref.dtype)
    h = jnp.dot(h, w2_ref[...], preferred_element_type=jnp.float32) + b2_ref[...]
    h = jnp.maximum(h, 0.0).astype(w3_ref.dtype)
    h = jnp.dot(h, w3_ref[...], preferred_element_type=jnp.float32) + b3_ref[...]
    o_ref[...] = h.astype(o_ref.dtype)


# ----------------------------------------------------------------------------
# Wrappers
# ----------------------------------------------------------------------------
def _pool_tap_patches(x_nhwc, kh, kw, k_pad):
    """im2col at pooled resolution: (N, 4, Hh*Wh, k_pad); K ordered (ki, kj, cin).

    Cheap channels-last glue (strided slices + one concat per tap); no 6-D
    transposes and no conv-resolution activation is ever written to HBM.
    """
    N, H, W, C = x_nhwc.shape
    Ho, Wo = H - kh + 1, W - kw + 1
    Hh, Wh = Ho // 2, Wo // 2
    taps = []
    for dy in range(2):
        for dx in range(2):
            cols = []
            for ki in range(kh):
                for kj in range(kw):
                    # x[n, 2*py+dy+ki, 2*px+dx+kj, c] for all pooled pixels (py, px)
                    sl = x_nhwc[:, dy + ki::2, dx + kj::2, :][:, :Hh, :Wh, :]
                    cols.append(sl)
            p = jnp.concatenate(cols, axis=-1).reshape(N, Hh * Wh, kh * kw * C)
            taps.append(p)
    patches = jnp.stack(taps, axis=1)  # (N, 4, S, K)
    k = kh * kw * C
    if k_pad > k:
        patches = jnp.pad(patches, ((0, 0), (0, 0), (0, 0), (0, k_pad - k)))
    return patches.astype(COMPUTE_DTYPE)


def conv_relu_pool(x_nhwc, wm, b, *, kh, kw, k_pad):
    """x_nhwc: (N, H, W, C_real) -> pooled activation (N, Hh, Wh, 128)."""
    N, H, W, _ = x_nhwc.shape
    Hh, Wh = (H - kh + 1) // 2, (W - kw + 1) // 2
    S = Hh * Wh
    patches = _pool_tap_patches(x_nhwc, kh, kw, k_pad)
    out = pl.pallas_call(
        _conv_relu_pool_kernel,
        out_shape=jax.ShapeDtypeStruct((N, S, LANES), jnp.float32),
        grid=(N,),
        in_specs=[
            pl.BlockSpec((1, 4, S, k_pad), lambda i: (i, 0, 0, 0)),
            pl.BlockSpec((k_pad, LANES), lambda i: (0, 0)),
            pl.BlockSpec((1, LANES), lambda i: (0, 0)),
        ],
        out_specs=pl.BlockSpec((1, S, LANES), lambda i: (i, 0, 0)),
        compiler_params=pltpu.CompilerParams(dimension_semantics=("parallel",)),
    )(patches, wm, b)
    return out.reshape(N, Hh, Wh, LANES)


def fc_fused(flat, kp):
    """flat: (N, 3200) channel-padded activation -> (N, 128) padded logits."""
    N, K = flat.shape
    z = lambda i: (0, 0)
    return pl.pallas_call(
        _fc_fused_kernel,
        out_shape=jax.ShapeDtypeStruct((N, LANES), jnp.float32),
        grid=(1,),
        in_specs=[
            pl.BlockSpec((N, K), z),
            pl.BlockSpec((K, LANES), z),
            pl.BlockSpec((1, LANES), z),
            pl.BlockSpec((LANES, LANES), z),
            pl.BlockSpec((1, LANES), z),
            pl.BlockSpec((LANES, LANES), z),
            pl.BlockSpec((1, LANES), z),
        ],
        out_specs=pl.BlockSpec((N, LANES), z),
    )(flat.astype(COMPUTE_DTYPE), kp["f1w"], kp["f1b"], kp["f2w"], kp["f2b"],
      kp["f3w"], kp["f3b"])


# ----------------------------------------------------------------------------
# Parameters (deterministic, PyTorch-default-style uniform init) + kernel layout
# ----------------------------------------------------------------------------
def init_params(key):
    def u(k, shape, fan_in):
        bound = 1.0 / jnp.sqrt(float(fan_in))
        return jax.random.uniform(k, shape, jnp.float32, -bound, bound)

    ks = jax.random.split(key, 10)
    return {
        "conv1_w": u(ks[0], (6, 3, 5, 5), 3 * 5 * 5),
        "conv1_b": u(ks[1], (6,), 3 * 5 * 5),
        "conv2_w": u(ks[2], (16, 6, 5, 5), 6 * 5 * 5),
        "conv2_b": u(ks[3], (16,), 6 * 5 * 5),
        "fc1_w": u(ks[4], (120, 400), 400),   # torch layout (out, in)
        "fc1_b": u(ks[5], (120,), 400),
        "fc2_w": u(ks[6], (84, 120), 120),
        "fc2_b": u(ks[7], (84,), 120),
        "fc3_w": u(ks[8], (10, 84), 84),
        "fc3_b": u(ks[9], (10,), 84),
    }


def prepare_params(p):
    """One-time conversion of torch-layout params to padded, kernel-ready matrices."""
    def conv_w(w, k_pad):
        cout, cin, kh, kw = w.shape
        # rows ordered (ki, kj, cin) to match the patch columns; pad K and Cout
        wm = w.transpose(2, 3, 1, 0).reshape(kh * kw * cin, cout)
        wm = jnp.pad(wm, ((0, k_pad - wm.shape[0]), (0, LANES - cout)))
        return wm.astype(COMPUTE_DTYPE)

    def bias_pad(b):
        return jnp.pad(b, (0, LANES - b.shape[0])).reshape(1, LANES).astype(jnp.float32)

    # fc1: torch (120, 400) with input index c*25 + y*5 + x; our flatten is
    # (y, x, c_padded) -> permute + pad the weight rows to (5*5*128, 128).
    w1 = p["fc1_w"].reshape(120, 16, 5, 5).transpose(2, 3, 1, 0)          # (5,5,16,120)
    w1 = jnp.pad(w1, ((0, 0), (0, 0), (0, LANES - 16), (0, LANES - 120)))  # (5,5,128,128)
    w1 = w1.reshape(5 * 5 * LANES, LANES).astype(COMPUTE_DTYPE)
    w2 = jnp.pad(p["fc2_w"].T, ((0, LANES - 120), (0, LANES - 84))).astype(COMPUTE_DTYPE)
    w3 = jnp.pad(p["fc3_w"].T, ((0, LANES - 84), (0, LANES - 10))).astype(COMPUTE_DTYPE)
    return {
        "c1w": conv_w(p["conv1_w"], 128), "c1b": bias_pad(p["conv1_b"]),
        "c2w": conv_w(p["conv2_w"], 256), "c2b": bias_pad(p["conv2_b"]),
        "f1w": w1, "f1b": bias_pad(p["fc1_b"]),
        "f2w": w2, "f2b": bias_pad(p["fc2_b"]),
        "f3w": w3, "f3b": bias_pad(p["fc3_b"]),
    }


# ----------------------------------------------------------------------------
# Forward pass (mirrors Net.forward)
# ----------------------------------------------------------------------------
def net_forward(kp, x):
    # x: (N, 3, 32, 32) NCHW, as at the PyTorch module boundary.
    n = x.shape[0]
    x = jnp.transpose(x, (0, 2, 3, 1))                                       # NHWC once
    a1 = conv_relu_pool(x, kp["c1w"], kp["c1b"], kh=5, kw=5, k_pad=128)      # (N,14,14,128)
    a2 = conv_relu_pool(a1[..., :6], kp["c2w"], kp["c2b"], kh=5, kw=5, k_pad=256)  # (N,5,5,128)
    flat = a2.reshape(n, 5 * 5 * LANES)   # torch flatten order absorbed into f1w permutation
    logits = fc_fused(flat, kp)           # (N, 128) lane-dense
    return logits[:, :10]


if __name__ == "__main__":
    key = jax.random.PRNGKey(0)
    kx, kp_key = jax.random.split(key)
    # Spatial size 32 is implied by fc1 = Linear(16*5*5, 120): 32 ->28->14->10->5.
    x = jax.random.normal(kx, (2, 3, 32, 32), jnp.float32)
    params = init_params(kp_key)
    kparams = prepare_params(params)

    out = jax.jit(net_forward)(kparams, x)
    out = jax.block_until_ready(out)
    assert out.shape == (2, 10) and out.dtype == jnp.float32
    print("KERNEL_OK")
</pallas_src>

<mosaic_0001>
module attributes {stable_mosaic.version = 11 : i64} {
  func.func @_conv_relu_pool_kernel(%arg0: i32, %arg1: memref<1x4x196x128xf32, #tpu.memory_space<vmem>>, %arg2: memref<128x128xf32, #tpu.memory_space<vmem>>, %arg3: memref<1x128xf32, #tpu.memory_space<vmem>>, %arg4: memref<1x196x128xf32, #tpu.memory_space<vmem>>) attributes {dimension_semantics = [#tpu.dimension_semantics<parallel>], iteration_bounds = array<i64: 2>, scalar_prefetch = 0 : i64, scratch_operands = 0 : i64, tpu.core_type = #tpu.core_type<tc>, window_params = [{transform_indices = @transform_0, window_bounds = array<i64: 1, 4, 196, 128>}, {pipeline_mode = #tpu.pipeline_mode<synchronous>, transform_indices = @transform_1, window_bounds = array<i64: 128, 128>}, {pipeline_mode = #tpu.pipeline_mode<synchronous>, transform_indices = @transform_2, window_bounds = array<i64: 1, 128>}, {transform_indices = @transform_3, window_bounds = array<i64: 1, 196, 128>}]} {
    %c0 = arith.constant 0 : index
    %c0_0 = arith.constant 0 : index
    %0 = vector.load %arg2[%c0, %c0_0] : memref<128x128xf32, #tpu.memory_space<vmem>>, vector<128x128xf32>
    %c0_1 = arith.constant 0 : index
    %c0_2 = arith.constant 0 : index
    %1 = vector.load %arg3[%c0_1, %c0_2] : memref<1x128xf32, #tpu.memory_space<vmem>>, vector<1x128xf32>
    %c0_3 = arith.constant 0 : index
    %c0_4 = arith.constant 0 : index
    %c0_5 = arith.constant 0 : index
    %c0_6 = arith.constant 0 : index
    %2 = vector.load %arg1[%c0_3, %c0_4, %c0_5, %c0_6] : memref<1x4x196x128xf32, #tpu.memory_space<vmem>>, vector<1x1x196x128xf32>
    %3 = vector.shape_cast %2 : vector<1x1x196x128xf32> to vector<196x128xf32>
    %cst = arith.constant dense<0.000000e+00> : vector<196x128xf32>
    %4 = tpu.matmul %3, %0, %cst {dimension_numbers = #tpu.dot_dimension_numbers<[1], [0], [0], [1], [0, 0, 1, 1], [], []>} : vector<196x128xf32>, vector<128x128xf32>, vector<196x128xf32> -> vector<196x128xf32>
    %5 = vector.broadcast %1 : vector<1x128xf32> to vector<196x128xf32>
    %6 = arith.addf %4, %5 : vector<196x128xf32>
    %cst_7 = arith.constant 0.000000e+00 : f32
    %7 = vector.broadcast %cst_7 : f32 to vector<196x128xf32>
    %8 = arith.maximumf %6, %7 : vector<196x128xf32>
    %c0_8 = arith.constant 0 : index
    %c1 = arith.constant 1 : index
    %c0_9 = arith.constant 0 : index
    %c0_10 = arith.constant 0 : index
    %9 = vector.load %arg1[%c0_8, %c1, %c0_9, %c0_10] : memref<1x4x196x128xf32, #tpu.memory_space<vmem>>, vector<1x1x196x128xf32>
    %10 = vector.shape_cast %9 : vector<1x1x196x128xf32> to vector<196x128xf32>
    %cst_11 = arith.constant dense<0.000000e+00> : vector<196x128xf32>
    %11 = tpu.matmul %10, %0, %cst_11 {dimension_numbers = #tpu.dot_dimension_numbers<[1], [0], [0], [1], [0, 0, 1, 1], [], []>} : vector<196x128xf32>, vector<128x128xf32>, vector<196x128xf32> -> vector<196x128xf32>
    %12 = vector.broadcast %1 : vector<1x128xf32> to vector<196x128xf32>
    %13 = arith.addf %11, %12 : vector<196x128xf32>
    %cst_12 = arith.constant 0.000000e+00 : f32
    %14 = vector.broadcast %cst_12 : f32 to vector<196x128xf32>
    %15 = arith.maximumf %13, %14 : vector<196x128xf32>
    %16 = arith.maximumf %8, %15 : vector<196x128xf32>
    %c0_13 = arith.constant 0 : index
    %c2 = arith.constant 2 : index
    %c0_14 = arith.constant 0 : index
    %c0_15 = arith.constant 0 : index
    %17 = vector.load %arg1[%c0_13, %c2, %c0_14, %c0_15] : memref<1x4x196x128xf32, #tpu.memory_space<vmem>>, vector<1x1x196x128xf32>
    %18 = vector.shape_cast %17 : vector<1x1x196x128xf32> to vector<196x128xf32>
    %cst_16 = arith.constant dense<0.000000e+00> : vector<196x128xf32>
    %19 = tpu.matmul %18, %0, %cst_16 {dimension_numbers = #tpu.dot_dimension_numbers<[1], [0], [0], [1], [0, 0, 1, 1], [], []>} : vector<196x128xf32>, vector<128x128xf32>, vector<196x128xf32> -> vector<196x128xf32>
    %20 = vector.broadcast %1 : vector<1x128xf32> to vector<196x128xf32>
    %21 = arith.addf %19, %20 : vector<196x128xf32>
    %cst_17 = arith.constant 0.000000e+00 : f32
    %22 = vector.broadcast %cst_17 : f32 to vector<196x128xf32>
    %23 = arith.maximumf %21, %22 : vector<196x128xf32>
    %24 = arith.maximumf %16, %23 : vector<196x128xf32>
    %c0_18 = arith.constant 0 : index
    %c3 = arith.constant 3 : index
    %c0_19 = arith.constant 0 : index
    %c0_20 = arith.constant 0 : index
    %25 = vector.load %arg1[%c0_18, %c3, %c0_19, %c0_20] : memref<1x4x196x128xf32, #tpu.memory_space<vmem>>, vector<1x1x196x128xf32>
    %26 = vector.shape_cast %25 : vector<1x1x196x128xf32> to vector<196x128xf32>
    %cst_21 = arith.constant dense<0.000000e+00> : vector<196x128xf32>
    %27 = tpu.matmul %26, %0, %cst_21 {dimension_numbers = #tpu.dot_dimension_numbers<[1], [0], [0], [1], [0, 0, 1, 1], [], []>} : vector<196x128xf32>, vector<128x128xf32>, vector<196x128xf32> -> vector<196x128xf32>
    %28 = vector.broadcast %1 : vector<1x128xf32> to vector<196x128xf32>
    %29 = arith.addf %27, %28 : vector<196x128xf32>
    %cst_22 = arith.constant 0.000000e+00 : f32
    %30 = vector.broadcast %cst_22 : f32 to vector<196x128xf32>
    %31 = arith.maximumf %29, %30 : vector<196x128xf32>
    %32 = arith.maximumf %24, %31 : vector<196x128xf32>
    %c0_23 = arith.constant 0 : index
    %c0_24 = arith.constant 0 : index
    %c0_25 = arith.constant 0 : index
    %33 = vector.load %arg4[%c0_23, %c0_24, %c0_25] : memref<1x196x128xf32, #tpu.memory_space<vmem>>, vector<1x196x128xf32>
    %34 = vector.shape_cast %33 : vector<1x196x128xf32> to vector<196x128xf32>
    %35 = vector.shape_cast %32 : vector<196x128xf32> to vector<1x196x128xf32>
    tpu.vector_store %arg4[%c0_23, %c0_24, %c0_25], %35 {strides = array<i32>} : memref<1x196x128xf32, #tpu.memory_space<vmem>>, vector<1x196x128xf32>,
    return
  }
  func.func @transform_0(%arg0: i32) -> (i32, i32, i32, i32) {
    %c0_i32 = arith.constant 0 : i32
    %c0_i32_0 = arith.constant 0 : i32
    %c0_i32_1 = arith.constant 0 : i32
    %c0_i32_2 = arith.constant 0 : i32
    return %arg0, %c0_i32, %c0_i32_0, %c0_i32_1 : i32, i32, i32, i32
  }
  func.func @transform_1(%arg0: i32) -> (i32, i32) {
    %c0_i32 = arith.constant 0 : i32
    %c0_i32_0 = arith.constant 0 : i32
    %c0_i32_1 = arith.constant 0 : i32
    return %c0_i32, %c0_i32_0 : i32, i32
  }
  func.func @transform_2(%arg0: i32) -> (i32, i32) {
    %c0_i32 = arith.constant 0 : i32
    %c0_i32_0 = arith.constant 0 : i32
    %c0_i32_1 = arith.constant 0 : i32
    return %c0_i32, %c0_i32_0 : i32, i32
  }
  func.func @transform_3(%arg0: i32) -> (i32, i32, i32) {
    %c0_i32 = arith.constant 0 : i32
    %c0_i32_0 = arith.constant 0 : i32
    %c0_i32_1 = arith.constant 0 : i32
    return %arg0, %c0_i32, %c0_i32_0 : i32, i32, i32
  }
}

module attributes {stable_mosaic.version = 11 : i64} {
  func.func @_fc_fused_kernel(%arg0: i32, %arg1: memref<2x3200xf32, #tpu.memory_space<vmem>>, %arg2: memref<3200x128xf32, #tpu.memory_space<vmem>>, %arg3: memref<1x128xf32, #tpu.memory_space<vmem>>, %arg4: memref<128x128xf32, #tpu.memory_space<vmem>>, %arg5: memref<1x128xf32, #tpu.memory_space<vmem>>, %arg6: memref<128x128xf32, #tpu.memory_space<vmem>>, %arg7: memref<1x128xf32, #tpu.memory_space<vmem>>, %arg8: memref<2x128xf32, #tpu.memory_space<vmem>>) attributes {dimension_semantics = [#tpu.dimension_semantics<arbitrary>], iteration_bounds = array<i64: 1>, scalar_prefetch = 0 : i64, scratch_operands = 0 : i64, tpu.core_type = #tpu.core_type<tc>, window_params = [{pipeline_mode = #tpu.pipeline_mode<synchronous>, transform_indices = @transform_0, window_bounds = array<i64: 2, 3200>}, {pipeline_mode = #tpu.pipeline_mode<synchronous>, transform_indices = @transform_1, window_bounds = array<i64: 3200, 128>}, {pipeline_mode = #tpu.pipeline_mode<synchronous>, transform_indices = @transform_2, window_bounds = array<i64: 1, 128>}, {pipeline_mode = #tpu.pipeline_mode<synchronous>, transform_indices = @transform_3, window_bounds = array<i64: 128, 128>}, {pipeline_mode = #tpu.pipeline_mode<synchronous>, transform_indices = @transform_4, window_bounds = array<i64: 1, 128>}, {pipeline_mode = #tpu.pipeline_mode<synchronous>, transform_indices = @transform_5, window_bounds = array<i64: 128, 128>}, {pipeline_mode = #tpu.pipeline_mode<synchronous>, transform_indices = @transform_6, window_bounds = array<i64: 1, 128>}, {pipeline_mode = #tpu.pipeline_mode<synchronous>, transform_indices = @transform_7, window_bounds = array<i64: 2, 128>}]} {
    %c0 = arith.constant 0 : index
    %c0_0 = arith.constant 0 : index
    %0 = vector.load %arg1[%c0, %c0_0] : memref<2x3200xf32, #tpu.memory_space<vmem>>, vector<2x3200xf32>
    %c0_1 = arith.constant 0 : index
    %c0_2 = arith.constant 0 : index
    %1 = vector.load %arg2[%c0_1, %c0_2] : memref<3200x128xf32, #tpu.memory_space<vmem>>, vector<3200x128xf32>
    %cst = arith.constant dense<0.000000e+00> : vector<2x128xf32>
    %2 = tpu.matmul %0, %1, %cst {dimension_numbers = #tpu.dot_dimension_numbers<[1], [0], [0], [1], [0, 0, 1, 1], [], []>} : vector<2x3200xf32>, vector<3200x128xf32>, vector<2x128xf32> -> vector<2x128xf32>
    %c0_3 = arith.constant 0 : index
    %c0_4 = arith.constant 0 : index
    %3 = vector.load %arg3[%c0_3, %c0_4] : memref<1x128xf32, #tpu.memory_space<vmem>>, vector<1x128xf32>
    %4 = vector.broadcast %3 : vector<1x128xf32> to vector<2x128xf32>
    %5 = arith.addf %2, %4 : vector<2x128xf32>
    %cst_5 = arith.constant 0.000000e+00 : f32
    %6 = vector.broadcast %cst_5 : f32 to vector<2x128xf32>
    %7 = arith.maximumf %5, %6 : vector<2x128xf32>
    %c0_6 = arith.constant 0 : index
    %c0_7 = arith.constant 0 : index
    %8 = vector.load %arg4[%c0_6, %c0_7] : memref<128x128xf32, #tpu.memory_space<vmem>>, vector<128x128xf32>
    %cst_8 = arith.constant dense<0.000000e+00> : vector<2x128xf32>
    %9 = tpu.matmul %7, %8, %cst_8 {dimension_numbers = #tpu.dot_dimension_numbers<[1], [0], [0], [1], [0, 0, 1, 1], [], []>} : vector<2x128xf32>, vector<128x128xf32>, vector<2x128xf32> -> vector<2x128xf32>
    %c0_9 = arith.constant 0 : index
    %c0_10 = arith.constant 0 : index
    %10 = vector.load %arg5[%c0_9, %c0_10] : memref<1x128xf32, #tpu.memory_space<vmem>>, vector<1x128xf32>
    %11 = vector.broadcast %10 : vector<1x128xf32> to vector<2x128xf32>
    %12 = arith.addf %9, %11 : vector<2x128xf32>
    %cst_11 = arith.constant 0.000000e+00 : f32
    %13 = vector.broadcast %cst_11 : f32 to vector<2x128xf32>
    %14 = arith.maximumf %12, %13 : vector<2x128xf32>
    %c0_12 = arith.constant 0 : index
    %c0_13 = arith.constant 0 : index
    %15 = vector.load %arg6[%c0_12, %c0_13] : memref<128x128xf32, #tpu.memory_space<vmem>>, vector<128x128xf32>
    %cst_14 = arith.constant dense<0.000000e+00> : vector<2x128xf32>
    %16 = tpu.matmul %14, %15, %cst_14 {dimension_numbers = #tpu.dot_dimension_numbers<[1], [0], [0], [1], [0, 0, 1, 1], [], []>} : vector<2x128xf32>, vector<128x128xf32>, vector<2x128xf32> -> vector<2x128xf32>
    %c0_15 = arith.constant 0 : index
    %c0_16 = arith.constant 0 : index
    %17 = vector.load %arg7[%c0_15, %c0_16] : memref<1x128xf32, #tpu.memory_space<vmem>>, vector<1x128xf32>
    %18 = vector.broadcast %17 : vector<1x128xf32> to vector<2x128xf32>
    %19 = arith.addf %16, %18 : vector<2x128xf32>
    %c0_17 = arith.constant 0 : index
    %c0_18 = arith.constant 0 : index
    %20 = vector.load %arg8[%c0_17, %c0_18] : memref<2x128xf32, #tpu.memory_space<vmem>>, vector<2x128xf32>
    tpu.vector_store %arg8[%c0_17, %c0_18], %19 {strides = array<i32>} : memref<2x128xf32, #tpu.memory_space<vmem>>, vector<2x128xf32>,
    return
  }
  func.func @transform_0(%arg0: i32) -> (i32, i32) {
    %c0_i32 = arith.constant 0 : i32
    %c0_i32_0 = arith.constant 0 : i32
    %c0_i32_1 = arith.constant 0 : i32
    return %c0_i32, %c0_i32_0 : i32, i32
  }
  func.func @transform_1(%arg0: i32) -> (i32, i32) {
    %c0_i32 = arith.constant 0 : i32
    %c0_i32_0 = arith.constant 0 : i32
    %c0_i32_1 = arith.constant 0 : i32
    return %c0_i32, %c0_i32_0 : i32, i32
  }
  func.func @transform_2(%arg0: i32) -> (i32, i32) {
    %c0_i32 = arith.constant 0 : i32
    %c0_i32_0 = arith.constant 0 : i32
    %c0_i32_1 = arith.constant 0 : i32
    return %c0_i32, %c0_i32_0 : i32, i32
  }
  func.func @transform_3(%arg0: i32) -> (i32, i32) {
    %c0_i32 = arith.constant 0 : i32
    %c0_i32_0 = arith.constant 0 : i32
    %c0_i32_1 = arith.constant 0 : i32
    return %c0_i32, %c0_i32_0 : i32, i32
  }
  func.func @transform_4(%arg0: i32) -> (i32, i32) {
    %c0_i32 = arith.constant 0 : i32
    %c0_i32_0 = arith.constant 0 : i32
    %c0_i32_1 = arith.constant 0 : i32
    return %c0_i32, %c0_i32_0 : i32, i32
  }
  func.func @transform_5(%arg0: i32) -> (i32, i32) {
    %c0_i32 = arith.constant 0 : i32
    %c0_i32_0 = arith.constant 0 : i32
    %c0_i32_1 = arith.constant 0 : i32
    return %c0_i32, %c0_i32_0 : i32, i32
  }
  func.func @transform_6(%arg0: i32) -> (i32, i32) {
    %c0_i32 = arith.constant 0 : i32
    %c0_i32_0 = arith.constant 0 : i32
    %c0_i32_1 = arith.constant 0 : i32
    return %c0_i32, %c0_i32_0 : i32, i32
  }
  func.func @transform_7(%arg0: i32) -> (i32, i32) {
    %c0_i32 = arith.constant 0 : i32
    %c0_i32_0 = arith.constant 0 : i32
    %c0_i32_1 = arith.constant 0 : i32
    return %c0_i32, %c0_i32_0 : i32, i32
  }
}

module attributes {stable_mosaic.version = 11 : i64} {
  func.func @_conv_relu_pool_kernel(%arg0: i32, %arg1: memref<1x4x25x256xf32, #tpu.memory_space<vmem>>, %arg2: memref<256x128xf32, #tpu.memory_space<vmem>>, %arg3: memref<1x128xf32, #tpu.memory_space<vmem>>, %arg4: memref<1x25x128xf32, #tpu.memory_space<vmem>>) attributes {dimension_semantics = [#tpu.dimension_semantics<parallel>], iteration_bounds = array<i64: 2>, scalar_prefetch = 0 : i64, scratch_operands = 0 : i64, tpu.core_type = #tpu.core_type<tc>, window_params = [{transform_indices = @transform_0, window_bounds = array<i64: 1, 4, 25, 256>}, {pipeline_mode = #tpu.pipeline_mode<synchronous>, transform_indices = @transform_1, window_bounds = array<i64: 256, 128>}, {pipeline_mode = #tpu.pipeline_mode<synchronous>, transform_indices = @transform_2, window_bounds = array<i64: 1, 128>}, {transform_indices = @transform_3, window_bounds = array<i64: 1, 25, 128>}]} {
    %c0 = arith.constant 0 : index
    %c0_0 = arith.constant 0 : index
    %0 = vector.load %arg2[%c0, %c0_0] : memref<256x128xf32, #tpu.memory_space<vmem>>, vector<256x128xf32>
    %c0_1 = arith.constant 0 : index
    %c0_2 = arith.constant 0 : index
    %1 = vector.load %arg3[%c0_1, %c0_2] : memref<1x128xf32, #tpu.memory_space<vmem>>, vector<1x128xf32>
    %c0_3 = arith.constant 0 : index
    %c0_4 = arith.constant 0 : index
    %c0_5 = arith.constant 0 : index
    %c0_6 = arith.constant 0 : index
    %2 = vector.load %arg1[%c0_3, %c0_4, %c0_5, %c0_6] : memref<1x4x25x256xf32, #tpu.memory_space<vmem>>, vector<1x1x25x256xf32>
    %3 = vector.shape_cast %2 : vector<1x1x25x256xf32> to vector<25x256xf32>
    %cst = arith.constant dense<0.000000e+00> : vector<25x128xf32>
    %4 = tpu.matmul %3, %0, %cst {dimension_numbers = #tpu.dot_dimension_numbers<[1], [0], [0], [1], [0, 0, 1, 1], [], []>} : vector<25x256xf32>, vector<256x128xf32>, vector<25x128xf32> -> vector<25x128xf32>
    %5 = vector.broadcast %1 : vector<1x128xf32> to vector<25x128xf32>
    %6 = arith.addf %4, %5 : vector<25x128xf32>
    %cst_7 = arith.constant 0.000000e+00 : f32
    %7 = vector.broadcast %cst_7 : f32 to vector<25x128xf32>
    %8 = arith.maximumf %6, %7 : vector<25x128xf32>
    %c0_8 = arith.constant 0 : index
    %c1 = arith.constant 1 : index
    %c0_9 = arith.constant 0 : index
    %c0_10 = arith.constant 0 : index
    %9 = vector.load %arg1[%c0_8, %c1, %c0_9, %c0_10] : memref<1x4x25x256xf32, #tpu.memory_space<vmem>>, vector<1x1x25x256xf32>
    %10 = vector.shape_cast %9 : vector<1x1x25x256xf32> to vector<25x256xf32>
    %cst_11 = arith.constant dense<0.000000e+00> : vector<25x128xf32>
    %11 = tpu.matmul %10, %0, %cst_11 {dimension_numbers = #tpu.dot_dimension_numbers<[1], [0], [0], [1], [0, 0, 1, 1], [], []>} : vector<25x256xf32>, vector<256x128xf32>, vector<25x128xf32> -> vector<25x128xf32>
    %12 = vector.broadcast %1 : vector<1x128xf32> to vector<25x128xf32>
    %13 = arith.addf %11, %12 : vector<25x128xf32>
    %cst_12 = arith.constant 0.000000e+00 : f32
    %14 = vector.broadcast %cst_12 : f32 to vector<25x128xf32>
    %15 = arith.maximumf %13, %14 : vector<25x128xf32>
    %16 = arith.maximumf %8, %15 : vector<25x128xf32>
    %c0_13 = arith.constant 0 : index
    %c2 = arith.constant 2 : index
    %c0_14 = arith.constant 0 : index
    %c0_15 = arith.constant 0 : index
    %17 = vector.load %arg1[%c0_13, %c2, %c0_14, %c0_15] : memref<1x4x25x256xf32, #tpu.memory_space<vmem>>, vector<1x1x25x256xf32>
    %18 = vector.shape_cast %17 : vector<1x1x25x256xf32> to vector<25x256xf32>
    %cst_16 = arith.constant dense<0.000000e+00> : vector<25x128xf32>
    %19 = tpu.matmul %18, %0, %cst_16 {dimension_numbers = #tpu.dot_dimension_numbers<[1], [0], [0], [1], [0, 0, 1, 1], [], []>} : vector<25x256xf32>, vector<256x128xf32>, vector<25x128xf32> -> vector<25x128xf32>
    %20 = vector.broadcast %1 : vector<1x128xf32> to vector<25x128xf32>
    %21 = arith.addf %19, %20 : vector<25x128xf32>
    %cst_17 = arith.constant 0.000000e+00 : f32
    %22 = vector.broadcast %cst_17 : f32 to vector<25x128xf32>
    %23 = arith.maximumf %21, %22 : vector<25x128xf32>
    %24 = arith.maximumf %16, %23 : vector<25x128xf32>
    %c0_18 = arith.constant 0 : index
    %c3 = arith.constant 3 : index
    %c0_19 = arith.constant 0 : index
    %c0_20 = arith.constant 0 : index
    %25 = vector.load %arg1[%c0_18, %c3, %c0_19, %c0_20] : memref<1x4x25x256xf32, #tpu.memory_space<vmem>>, vector<1x1x25x256xf32>
    %26 = vector.shape_cast %25 : vector<1x1x25x256xf32> to vector<25x256xf32>
    %cst_21 = arith.constant dense<0.000000e+00> : vector<25x128xf32>
    %27 = tpu.matmul %26, %0, %cst_21 {dimension_numbers = #tpu.dot_dimension_numbers<[1], [0], [0], [1], [0, 0, 1, 1], [], []>} : vector<25x256xf32>, vector<256x128xf32>, vector<25x128xf32> -> vector<25x128xf32>
    %28 = vector.broadcast %1 : vector<1x128xf32> to vector<25x128xf32>
    %29 = arith.addf %27, %28 : vector<25x128xf32>
    %cst_22 = arith.constant 0.000000e+00 : f32
    %30 = vector.broadcast %cst_22 : f32 to vector<25x128xf32>
    %31 = arith.maximumf %29, %30 : vector<25x128xf32>
    %32 = arith.maximumf %24, %31 : vector<25x128xf32>
    %c0_23 = arith.constant 0 : index
    %c0_24 = arith.constant 0 : index
    %c0_25 = arith.constant 0 : index
    %33 = vector.load %arg4[%c0_23, %c0_24, %c0_25] : memref<1x25x128xf32, #tpu.memory_space<vmem>>, vector<1x25x128xf32>
    %34 = vector.shape_cast %33 : vector<1x25x128xf32> to vector<25x128xf32>
    %35 = vector.shape_cast %32 : vector<25x128xf32> to vector<1x25x128xf32>
    tpu.vector_store %arg4[%c0_23, %c0_24, %c0_25], %35 {strides = array<i32>} : memref<1x25x128xf32, #tpu.memory_space<vmem>>, vector<1x25x128xf32>,
    return
  }
  func.func @transform_0(%arg0: i32) -> (i32, i32, i32, i32) {
    %c0_i32 = arith.constant 0 : i32
    %c0_i32_0 = arith.constant 0 : i32
    %c0_i32_1 = arith.constant 0 : i32
    %c0_i32_2 = arith.constant 0 : i32
    return %arg0, %c0_i32, %c0_i32_0, %c0_i32_1 : i32, i32, i32, i32
  }
  func.func @transform_1(%arg0: i32) -> (i32, i32) {
    %c0_i32 = arith.constant 0 : i32
    %c0_i32_0 = arith.constant 0 : i32
    %c0_i32_1 = arith.constant 0 : i32
    return %c0_i32, %c0_i32_0 : i32, i32
  }
  func.func @transform_2(%arg0: i32) -> (i32, i32) {
    %c0_i32 = arith.constant 0 : i32
    %c0_i32_0 = arith.constant 0 : i32
    %c0_i32_1 = arith.constant 0 : i32
    return %c0_i32, %c0_i32_0 : i32, i32
  }
  func.func @transform_3(%arg0: i32) -> (i32, i32, i32) {
    %c0_i32 = arith.constant 0 : i32
    %c0_i32_0 = arith.constant 0 : i32
    %c0_i32_1 = arith.constant 0 : i32
    return %arg0, %c0_i32, %c0_i32_0 : i32, i32, i32
  }
}

</mosaic_0001>

<llo_original>
// kernel: net_forward.3
$region0: #{net_forward.3}
  #allocation0 [shape = 'u32[]', space=smem, size = 0x4, offset = 0x4, fixed_abs, tag = 'smem constant byte address 0x4 - core index']
  #allocation1 [shape = 'u32[72,128]{1,0:T(1,128)}', space=vmem, size = 0x9000, scoped, tag = 'internal scratch']
  %s0 = inlined_call_operand.vmem [shape: f32[2,4,196,128], index: 0, kind: input, shape index: {}]
  %s1 = inlined_call_operand.vmem [shape: f32[128,128], index: 1, kind: input, shape index: {}]
  %s2 = inlined_call_operand.vmem [shape: f32[1,128], index: 2, kind: input, shape index: {}]
  %s3 = inlined_call_operand.vmem [shape: f32[2,196,128], index: 3, kind: output, shape index: {}]
  %s4 = sld [smem:[#allocation0]]
  $region45: #{net_forward.3} parent=0
    _
  %s6 = ssub.s32 1, %s4
  %s7 = scalar_select 0, %s6, %s4
  loop: start=0, step=1, limit=4
  $region2: #{net_forward.3} parent=0 // loop_pre_header
    _
  $region3: #{net_forward.3} parent=0 // loop_header
    %s9 = sphi 0, %s13
    %p10 = scmp.ge.s32.totalorder %s9, 4
    %s19 = sphi 0, %s21
    %s22 = sphi 0, %s19
    %s23 = sphi 0, %s22
    %s39 = sphi 0, %s23
    %s43 = sphi 0, %s43
    %s45 = sphi 0, %s43
    %s46 = sphi 0, %s45
    %s60 = sphi 0, %s46
    %s64 = sphi 0, %s64
    %s66 = sphi 0, %s64
    %s67 = sphi 0, %s66
    %s81 = sphi 0, %s67
    %s87 = sphi 0, %s89
    %s90 = sphi 0, %s87
    %s91 = sphi 0, %s90
    %s107 = sphi 0, %s91
  $region4: #{net_forward.3} parent=0 // loop_header_branch
    %12 = sbr.rel (%p10) target = $region8
  $region5: #{net_forward.3} parent=0 // loop_body
    %s14 = ssub.s32 %s9, 1
    %s15 = ssub.s32 %s9, 2
    %s16 = sadd.s32 %s9, 1
    %s17 = ssub.s32 %s9, %s16
    %p18 = scmp.eq.s32.totalorder %s17, 0
    %s20 = sadd.s32 %s19, 1
    %s21 = scalar_select %p18, %s19, %s20
    %p24 = pneg %p18
    %p25 = scmp.eq.s32.totalorder %s9, 1
    %p26 = por %p24, %p25
    %p27 = scmp.ne.s32.totalorder %s19, %s22
    %p28 = scmp.eq.s32.totalorder %s9, 0
    %p29 = por %p27, %p28
    %p30 = scmp.ne.s32.totalorder %s19, %s22
    %p31 = scmp.eq.s32.totalorder %s14, 1
    %p32 = por %p30, %p31
    %p33 = scmp.ne.s32.totalorder %s22, %s23
    %p34 = scmp.eq.s32.totalorder %s14, 0
    %p35 = por %p33, %p34
    %p36 = scmp.ne.s32.totalorder %s22, %s23
    %p37 = scmp.eq.s32.totalorder %s15, 1
    %p38 = por %p36, %p37
    %p40 = scmp.ne.s32.totalorder %s23, %s39
    %p41 = scmp.eq.s32.totalorder %s15, 0
    %p42 = por %p40, %p41
    %s44 = sadd.s32 %s43, 1
    %p47 = scmp.eq.s32.totalorder %s9, 1
    %p48 = scmp.ne.s32.totalorder %s43, %s45
    %p49 = scmp.eq.s32.totalorder %s9, 0
    %p50 = por %p48, %p49
    %p51 = scmp.ne.s32.totalorder %s43, %s45
    %p52 = scmp.eq.s32.totalorder %s14, 1
    %p53 = por %p51, %p52
    %p54 = scmp.ne.s32.totalorder %s45, %s46
    %p55 = scmp.eq.s32.totalorder %s14, 0
    %p56 = por %p54, %p55
    %p57 = scmp.ne.s32.totalorder %s45, %s46
    %p58 = scmp.eq.s32.totalorder %s15, 1
    %p59 = por %p57, %p58
    %p61 = scmp.ne.s32.totalorder %s46, %s60
    %p62 = scmp.eq.s32.totalorder %s15, 0
    %p63 = por %p61, %p62
    %s65 = sadd.s32 %s64, 1
    %p68 = scmp.eq.s32.totalorder %s9, 1
    %p69 = scmp.ne.s32.totalorder %s64, %s66
    %p70 = scmp.eq.s32.totalorder %s9, 0
    %p71 = por %p69, %p70
    %p72 = scmp.ne.s32.totalorder %s64, %s66
    %p73 = scmp.eq.s32.totalorder %s14, 1
    %p74 = por %p72, %p73
    %p75 = scmp.ne.s32.totalorder %s66, %s67
    %p76 = scmp.eq.s32.totalorder %s14, 0
    %p77 = por %p75, %p76
    %p78 = scmp.ne.s32.totalorder %s66, %s67
    %p79 = scmp.eq.s32.totalorder %s15, 1
    %p80 = por %p78, %p79
    %p82 = scmp.ne.s32.totalorder %s67, %s81
    %p83 = scmp.eq.s32.totalorder %s15, 0
    %p84 = por %p82, %p83
    %s85 = ssub.s32 %s9, %s16
    %p86 = scmp.eq.s32.totalorder %s85, 0
    %s88 = sadd.s32 %s87, 1
    %s89 = scalar_select %p86, %s87, %s88
    %p92 = pneg %p86
    %p93 = scmp.eq.s32.totalorder %s9, 1
    %p94 = por %p92, %p93
    %p95 = scmp.ne.s32.totalorder %s87, %s90
    %p96 = scmp.eq.s32.totalorder %s9, 0
    %p97 = por %p95, %p96
    %p98 = scmp.ne.s32.totalorder %s87, %s90
    %p99 = scmp.eq.s32.totalorder %s14, 1
    %p100 = por %p98, %p99
    %p101 = scmp.ne.s32.totalorder %s90, %s91
    %p102 = scmp.eq.s32.totalorder %s14, 0
    %p103 = por %p101, %p102
    %p104 = scmp.ne.s32.totalorder %s90, %s91
    %p105 = scmp.eq.s32.totalorder %s15, 1
    %p106 = por %p104, %p105
    %p108 = scmp.ne.s32.totalorder %s91, %s107
    %p109 = scmp.eq.s32.totalorder %s15, 0
    %p110 = por %p108, %p109
    %p111 = scmp.le.s32.totalorder 1, %s9
    %p112 = scmp.lt.s32.totalorder %s9, 3
    %p113 = pnand %p111, %p112
    %p114 = pneg %p113
    // Predicated region
    $region9: #{net_forward.3} parent=5 // pred_check
      _
    $region10: #{net_forward.3} parent=5 // pred_check_branch
      %116 = sbr.rel (%p113) target = $region12
    $region11: #{net_forward.3} parent=5 // pred_region
      %s117 = ssub.s32 %s9, 1
      // Predicated region
      $region13: #{net_forward.3} parent=11 // pred_check
        %p118 = pneg %p56
      $region14: #{net_forward.3} parent=11 // pred_check_branch
        %120 = sbr.rel (%p118) target = $region16
      $region15: #{net_forward.3} parent=11 // pred_region
        _
      $region16: #{net_forward.3} parent=11 // pred_fallthru
        _
      // Predicated region
      $region17: #{net_forward.3} parent=11 // pred_check
        %p121 = pneg %p77
      $region18: #{net_forward.3} parent=11 // pred_check_branch
        %123 = sbr.rel (%p121) target = $region20
      $region19: #{net_forward.3} parent=11 // pred_region
        _
      $region20: #{net_forward.3} parent=11 // pred_fallthru
        _
    $region12: #{net_forward.3} parent=5 // pred_fallthru
      _
    %p124 = scmp.lt.s32.totalorder %s9, 2
    // Predicated region
    $region21: #{net_forward.3} parent=5 // pred_check
      %p125 = pneg %p124
    $region22: #{net_forward.3} parent=5 // pred_check_branch
      %127 = sbr.rel (%p125) target = $region24
    $region23: #{net_forward.3} parent=5 // pred_region
      // Predicated region
      $region25: #{net_forward.3} parent=23 // pred_check
        %p128 = pneg %p29
      $region26: #{net_forward.3} parent=23 // pred_check_branch
        %130 = sbr.rel (%p128) target = $region28
      $region27: #{net_forward.3} parent=23 // pred_region
        %p131 = scmp.lt.s32.totalorder %s9, 1
        %s132 = scalar_select %p131, %s9, 1
        %s133 = smul.addr %s132, 100
        %s134 = smul.addr %s133, 8
        %s135 = scalar_lea.vmem %s0, %s134
      $region28: #{net_forward.3} parent=23 // pred_fallthru
        _
    $region24: #{net_forward.3} parent=5 // pred_fallthru
      _
    %p136 = scmp.le.s32.totalorder 1, %s9
    %p137 = scmp.lt.s32.totalorder %s9, 3
    %p138 = pnand %p136, %p137
    %p139 = pneg %p138
    // Predicated region
    $region29: #{net_forward.3} parent=5 // pred_check
      _
    $region30: #{net_forward.3} parent=5 // pred_check_branch
      %141 = sbr.rel (%p138) target = $region32
    $region31: #{net_forward.3} parent=5 // pred_region
      %s142 = ssub.s32 %s9, 1
      %p143 = scmp.lt.s32.totalorder %s14, 1
      %s144 = scalar_select %p143, %s14, 1
      %s145 = smul.addr %s144, 100
      %s146 = smul.addr %s145, 8
      %s147 = scalar_lea.vmem %s0, %s146
      %p148 = pneg %p35
      %p149 = pneg %p32
      %p150 = pneg %p56
      %p151 = pneg %p53
      %p152 = pneg %p77
      %p153 = pneg %p74
      %p154 = pneg %p103
      %p155 = pneg %p100
      %p156 = scmp.lt.s32.totalorder %s14, 1
      %s157 = scalar_select %p156, %s14, 1
      %s158 = smul.addr %s157, 25
      %s159 = smul.addr %s158, 8
      %s160 = scalar_lea.vmem %s3, %s159
      %p161 = scmp.lt.s32.totalorder %s14, 1
      %s162 = scalar_select %p161, %s14, 1
      %s163 = smul.addr %s162, 100
      %s164 = smul.addr %s163, 8
      %s165 = scalar_lea.vmem %s0, %s164
      %p166 = scmp.lt.s32.totalorder %s14, 1
      %s167 = scalar_select %p166, %s14, 1
      %s168 = smul.addr %s167, 25
      %s169 = smul.addr %s168, 8
      %s170 = scalar_lea.vmem %s3, %s169
      %v171 = vld [vmem:[%s1] sm:$0xff]
      %v172 = vld [vmem:[%s1 + $0x8] sm:$0xff]
      %v173 = vld [vmem:[%s1 + $0x10] sm:$0xff]
      %v174 = vld [vmem:[%s1 + $0x18] sm:$0xff]
      %v175 = vld [vmem:[%s1 + $0x20] sm:$0xff]
      %v176 = vld [vmem:[%s1 + $0x28] sm:$0xff]
      %v177 = vld [vmem:[%s1 + $0x30] sm:$0xff]
      %v178 = vld [vmem:[%s1 + $0x38] sm:$0xff]
      %v179 = vld [vmem:[%s1 + $0x40] sm:$0xff]
      %v180 = vld [vmem:[%s1 + $0x48] sm:$0xff]
      %v181 = vld [vmem:[%s1 + $0x50] sm:$0xff]
      %v182 = vld [vmem:[%s1 + $0x58] sm:$0xff]
      %v183 = vld [vmem:[%s1 + $0x60] sm:$0xff]
      %v184 = vld [vmem:[%s1 + $0x68] sm:$0xff]
      %v185 = vld [vmem:[%s1 + $0x70] sm:$0xff]
      %v186 = vld [vmem:[%s1 + $0x78] sm:$0xff]
      %v187 = vld [vmem:[%s2] sm:$0x1]
      %v188 = vld [vmem:[%s165] sm:$0xff]
      %v189 = vld [vmem:[%s165 + $0x8] sm:$0xff]
      %v190 = vld [vmem:[%s165 + $0x10] sm:$0xff]
      %v191 = vld [vmem:[%s165 + $0x18] sm:$0xff]
      %v192 = vld [vmem:[%s165 + $0x20] sm:$0xff]
      %v193 = vld [vmem:[%s165 + $0x28] sm:$0xff]
      %v194 = vld [vmem:[%s165 + $0x30] sm:$0xff]
      %v195 = vld [vmem:[%s165 + $0x38] sm:$0xff]
      %v196 = vld [vmem:[%s165 + $0x40] sm:$0xff]
      %v197 = vld [vmem:[%s165 + $0x48] sm:$0xff]
      %v198 = vld [vmem:[%s165 + $0x50] sm:$0xff]
      %v199 = vld [vmem:[%s165 + $0x58] sm:$0xff]
      %v200 = vld [vmem:[%s165 + $0x60] sm:$0xff]
      %v201 = vld [vmem:[%s165 + $0x68] sm:$0xff]
      %v202 = vld [vmem:[%s165 + $0x70] sm:$0xff]
      %v203 = vld [vmem:[%s165 + $0x78] sm:$0xff]
      %v204 = vld [vmem:[%s165 + $0x80] sm:$0xff]
      %v205 = vld [vmem:[%s165 + $0x88] sm:$0xff]
      %v206 = vld [vmem:[%s165 + $0x90] sm:$0xff]
      %v207 = vld [vmem:[%s165 + $0x98] sm:$0xff]
      %v208 = vld [vmem:[%s165 + $0xa0] sm:$0xff]
      %v209 = vld [vmem:[%s165 + $0xa8] sm:$0xff]
      %v210 = vld [vmem:[%s165 + $0xb0] sm:$0xff]
      %v211 = vld [vmem:[%s165 + $0xb8] sm:$0xff]
      %v212 = vld [vmem:[%s165 + $0xc0] sm:$0xf]
      %v214 = vperm.slane %v187, 0
      %216 = vmatpush.msra.mxu0 %v186
      %217 = vmatpush.msra.mxu0 %v185
      %218 = vmatpush.msra.mxu0 %v184
      %219 = vmatpush.msra.mxu0 %v183
      %220 = vmatpush.msra.mxu0 %v182
      %221 = vmatpush.msra.mxu0 %v181
      %222 = vmatpush.msra.mxu0 %v180
      %223 = vmatpush.msra.mxu0 %v179
      %224 = vmatpush.msra.mxu0 %v178
      %225 = vmatpush.msra.mxu0 %v177
      %226 = vmatpush.msra.mxu0 %v176
      %227 = vmatpush.msra.mxu0 %v175
      %228 = vmatpush.msra.mxu0 %v174
      %229 = vmatpush.msra.mxu0 %v173
      %230 = vmatpush.msra.mxu0 %v172
      %231 = vmatpush.msra.mxu0 %v171
      %232 = vmatmul.f32.gmra.mxu0 %v188
      %v233 = vpop.f32.mrf.mxu0
      %v234 = vadd.f32 %v214, %v233
      %235 = vmatmul.f32.gmra.mxu0 %v189
      %v236 = vpop.f32.mrf.mxu0
      %v237 = vadd.f32 %v214, %v236
      %238 = vmatmul.f32.gmra.mxu0 %v190
      %v239 = vpop.f32.mrf.mxu0
      %v240 = vadd.f32 %v214, %v239
      %241 = vmatmul.f32.gmra.mxu0 %v191
      %v242 = vpop.f32.mrf.mxu0
      %v243 = vadd.f32 %v214, %v242
      %244 = vmatmul.f32.gmra.mxu0 %v192
      %v245 = vpop.f32.mrf.mxu0
      %v246 = vadd.f32 %v214, %v245
      %247 = vmatmul.f32.gmra.mxu0 %v193
      %v248 = vpop.f32.mrf.mxu0
      %v249 = vadd.f32 %v214, %v248
      %250 = vmatmul.f32.gmra.mxu0 %v194
      %v251 = vpop.f32.mrf.mxu0
      %v252 = vadd.f32 %v214, %v251
      %253 = vmatmul.f32.gmra.mxu0 %v195
      %v254 = vpop.f32.mrf.mxu0
      %v255 = vadd.f32 %v214, %v254
      %256 = vmatmul.f32.gmra.mxu0 %v196
      %v257 = vpop.f32.mrf.mxu0
      %v258 = vadd.f32 %v214, %v257
      %259 = vmatmul.f32.gmra.mxu0 %v197
      %v260 = vpop.f32.mrf.mxu0
      %v261 = vadd.f32 %v214, %v260
      %262 = vmatmul.f32.gmra.mxu0 %v198
      %v263 = vpop.f32.mrf.mxu0
      %v264 = vadd.f32 %v214, %v263
      %265 = vmatmul.f32.gmra.mxu0 %v199
      %v266 = vpop.f32.mrf.mxu0
      %v267 = vadd.f32 %v214, %v266
      %268 = vmatmul.f32.gmra.mxu0 %v200
      %v269 = vpop.f32.mrf.mxu0
      %v270 = vadd.f32 %v214, %v269
      %271 = vmatmul.f32.gmra.mxu0 %v201
      %v272 = vpop.f32.mrf.mxu0
      %v273 = vadd.f32 %v214, %v272
      %274 = vmatmul.f32.gmra.mxu0 %v202
      %v275 = vpop.f32.mrf.mxu0
      %v276 = vadd.f32 %v214, %v275
      %277 = vmatmul.f32.gmra.mxu0 %v203
      %v278 = vpop.f32.mrf.mxu0
      %v279 = vadd.f32 %v214, %v278
      %280 = vmatmul.f32.gmra.mxu0 %v204
      %v281 = vpop.f32.mrf.mxu0
      %v282 = vadd.f32 %v214, %v281
      %283 = vmatmul.f32.gmra.mxu0 %v205
      %v284 = vpop.f32.mrf.mxu0
      %v285 = vadd.f32 %v214, %v284
      %286 = vmatmul.f32.gmra.mxu0 %v206
      %v287 = vpop.f32.mrf.mxu0
      %v288 = vadd.f32 %v214, %v287
      %289 = vmatmul.f32.gmra.mxu0 %v207
      %v290 = vpop.f32.mrf.mxu0
      %v291 = vadd.f32 %v214, %v290
      %292 = vmatmul.f32.gmra.mxu0 %v208
      %v293 = vpop.f32.mrf.mxu0
      %v294 = vadd.f32 %v214, %v293
      %295 = vmatmul.f32.gmra.mxu0 %v209
      %v296 = vpop.f32.mrf.mxu0
      %v297 = vadd.f32 %v214, %v296
      %298 = vmatmul.f32.gmra.mxu0 %v210
      %v299 = vpop.f32.mrf.mxu0
      %v300 = vadd.f32 %v214, %v299
      %301 = vmatmul.f32.gmra.mxu0 %v211
      %v302 = vpop.f32.mrf.mxu0
      %v303 = vadd.f32 %v214, %v302
      %304 = vmatmul.f32.gmra.mxu0 %v212
      %v305 = vpop.f32.mrf.mxu0
      %v306 = vadd.f32 %v214, %v305
      %307 = vdwg.mxu0
      %v308 = vmax.f32 %v234, 0.0
      %v309 = vmax.f32 %v237, 0.0
      %v310 = vmax.f32 %v240, 0.0
      %v311 = vmax.f32 %v243, 0.0
      %v312 = vmax.f32 %v246, 0.0
      %v313 = vmax.f32 %v249, 0.0
      %v314 = vmax.f32 %v252, 0.0
      %v315 = vmax.f32 %v255, 0.0
      %v316 = vmax.f32 %v258, 0.0
      %v317 = vmax.f32 %v261, 0.0
      %v318 = vmax.f32 %v264, 0.0
      %v319 = vmax.f32 %v267, 0.0
      %v320 = vmax.f32 %v270, 0.0
      %v321 = vmax.f32 %v273, 0.0
      %v322 = vmax.f32 %v276, 0.0
      %v323 = vmax.f32 %v279, 0.0
      %v324 = vmax.f32 %v282, 0.0
      %v325 = vmax.f32 %v285, 0.0
      %v326 = vmax.f32 %v288, 0.0
      %v327 = vmax.f32 %v291, 0.0
      %v328 = vmax.f32 %v294, 0.0
      %v329 = vmax.f32 %v297, 0.0
      %v330 = vmax.f32 %v300, 0.0
      %v331 = vmax.f32 %v303, 0.0
      %v332 = vmax.f32 %v306, 0.0
      %s333 = scalar_lea.vmem %s165, 200
      %v334 = vld [vmem:[%s333] sm:$0xff]
      %v335 = vld [vmem:[%s333 + $0x8] sm:$0xff]
      %v336 = vld [vmem:[%s333 + $0x10] sm:$0xff]
      %v337 = vld [vmem:[%s333 + $0x18] sm:$0xff]
      %v338 = vld [vmem:[%s333 + $0x20] sm:$0xff]
      %v339 = vld [vmem:[%s333 + $0x28] sm:$0xff]
      %v340 = vld [vmem:[%s333 + $0x30] sm:$0xff]
      %v341 = vld [vmem:[%s333 + $0x38] sm:$0xff]
      %v342 = vld [vmem:[%s333 + $0x40] sm:$0xff]
      %v343 = vld [vmem:[%s333 + $0x48] sm:$0xff]
      %v344 = vld [vmem:[%s333 + $0x50] sm:$0xff]
      %v345 = vld [vmem:[%s333 + $0x58] sm:$0xff]
      %v346 = vld [vmem:[%s333 + $0x60] sm:$0xff]
      %v347 = vld [vmem:[%s333 + $0x68] sm:$0xff]
      %v348 = vld [vmem:[%s333 + $0x70] sm:$0xff]
      %v349 = vld [vmem:[%s333 + $0x78] sm:$0xff]
      %v350 = vld [vmem:[%s333 + $0x80] sm:$0xff]
      %v351 = vld [vmem:[%s333 + $0x88] sm:$0xff]
      %v352 = vld [vmem:[%s333 + $0x90] sm:$0xff]
      %v353 = vld [vmem:[%s333 + $0x98] sm:$0xff]
      %v354 = vld [vmem:[%s333 + $0xa0] sm:$0xff]
      %v355 = vld [vmem:[%s333 + $0xa8] sm:$0xff]
      %v356 = vld [vmem:[%s333 + $0xb0] sm:$0xff]
      %v357 = vld [vmem:[%s333 + $0xb8] sm:$0xff]
      %v358 = vld [vmem:[%s333 + $0xc0] sm:$0xf]
      %359 = vmatpush.msra.mxu0 %v186
      %360 = vmatpush.msra.mxu0 %v185
      %361 = vmatpush.msra.mxu0 %v184
      %362 = vmatpush.msra.mxu0 %v183
      %363 = vmatpush.msra.mxu0 %v182
      %364 = vmatpush.msra.mxu0 %v181
      %365 = vmatpush.msra.mxu0 %v180
      %366 = vmatpush.msra.mxu0 %v179
      %367 = vmatpush.msra.mxu0 %v178
      %368 = vmatpush.msra.mxu0 %v177
      %369 = vmatpush.msra.mxu0 %v176
      %370 = vmatpush.msra.mxu0 %v175
      %371 = vmatpush.msra.mxu0 %v174
      %372 = vmatpush.msra.mxu0 %v173
      %373 = vmatpush.msra.mxu0 %v172
      %374 = vmatpush.msra.mxu0 %v171
      %375 = vmatmul.f32.gmra.mxu0 %v334
      %v376 = vpop.f32.mrf.mxu0
      %v377 = vadd.f32 %v214, %v376
      %378 = vmatmul.f32.gmra.mxu0 %v335
      %v379 = vpop.f32.mrf.mxu0
      %v380 = vadd.f32 %v214, %v379
      %381 = vmatmul.f32.gmra.mxu0 %v336
      %v382 = vpop.f32.mrf.mxu0
      %v383 = vadd.f32 %v214, %v382
      %384 = vmatmul.f32.gmra.mxu0 %v337
      %v385 = vpop.f32.mrf.mxu0
      %v386 = vadd.f32 %v214, %v385
      %387 = vmatmul.f32.gmra.mxu0 %v338
      %v388 = vpop.f32.mrf.mxu0
      %v389 = vadd.f32 %v214, %v388
      %390 = vmatmul.f32.gmra.mxu0 %v339
      %v391 = vpop.f32.mrf.mxu0
      %v392 = vadd.f32 %v214, %v391
      %393 = vmatmul.f32.gmra.mxu0 %v340
      %v394 = vpop.f32.mrf.mxu0
      %v395 = vadd.f32 %v214, %v394
      %396 = vmatmul.f32.gmra.mxu0 %v341
      %v397 = vpop.f32.mrf.mxu0
      %v398 = vadd.f32 %v214, %v397
      %399 = vmatmul.f32.gmra.mxu0 %v342
      %v400 = vpop.f32.mrf.mxu0
      %v401 = vadd.f32 %v214, %v400
      %402 = vmatmul.f32.gmra.mxu0 %v343
      %v403 = vpop.f32.mrf.mxu0
      %v404 = vadd.f32 %v214, %v403
      %405 = vmatmul.f32.gmra.mxu0 %v344
      %v406 = vpop.f32.mrf.mxu0
      %v407 = vadd.f32 %v214, %v406
      %408 = vmatmul.f32.gmra.mxu0 %v345
      %v409 = vpop.f32.mrf.mxu0
      %v410 = vadd.f32 %v214, %v409
      %411 = vmatmul.f32.gmra.mxu0 %v346
      %v412 = vpop.f32.mrf.mxu0
      %v413 = vadd.f32 %v214, %v412
      %414 = vmatmul.f32.gmra.mxu0 %v347
      %v415 = vpop.f32.mrf.mxu0
      %v416 = vadd.f32 %v214, %v415
      %417 = vmatmul.f32.gmra.mxu0 %v348
      %v418 = vpop.f32.mrf.mxu0
      %v419 = vadd.f32 %v214, %v418
      %420 = vmatmul.f32.gmra.mxu0 %v349
      %v421 = vpop.f32.mrf.mxu0
      %v422 = vadd.f32 %v214, %v421
      %423 = vmatmul.f32.gmra.mxu0 %v350
      %v424 = vpop.f32.mrf.mxu0
      %v425 = vadd.f32 %v214, %v424
      %426 = vmatmul.f32.gmra.mxu0 %v351
      %v427 = vpop.f32.mrf.mxu0
      %v428 = vadd.f32 %v214, %v427
      %429 = vmatmul.f32.gmra.mxu0 %v352
      %v430 = vpop.f32.mrf.mxu0
      %v431 = vadd.f32 %v214, %v430
      %432 = vmatmul.f32.gmra.mxu0 %v353
      %v433 = vpop.f32.mrf.mxu0
      %v434 = vadd.f32 %v214, %v433
      %435 = vmatmul.f32.gmra.mxu0 %v354
      %v436 = vpop.f32.mrf.mxu0
      %v437 = vadd.f32 %v214, %v436
      %438 = vmatmul.f32.gmra.mxu0 %v355
      %v439 = vpop.f32.mrf.mxu0
      %v440 = vadd.f32 %v214, %v439
      %441 = vmatmul.f32.gmra.mxu0 %v356
      %v442 = vpop.f32.mrf.mxu0
      %v443 = vadd.f32 %v214, %v442
      %444 = vmatmul.f32.gmra.mxu0 %v357
      %v445 = vpop.f32.mrf.mxu0
      %v446 = vadd.f32 %v214, %v445
      %447 = vmatmul.f32.gmra.mxu0 %v358
      %v448 = vpop.f32.mrf.mxu0
      %v449 = vadd.f32 %v214, %v448
      %450 = vdwg.mxu0
      %v451 = vmax.f32 %v377, 0.0
      %v452 = vmax.f32 %v380, 0.0
      %v453 = vmax.f32 %v383, 0.0
      %v454 = vmax.f32 %v386, 0.0
      %v455 = vmax.f32 %v389, 0.0
      %v456 = vmax.f32 %v392, 0.0
      %v457 = vmax.f32 %v395, 0.0
      %v458 = vmax.f32 %v398, 0.0
      %v459 = vmax.f32 %v401, 0.0
      %v460 = vmax.f32 %v404, 0.0
      %v461 = vmax.f32 %v407, 0.0
      %v462 = vmax.f32 %v410, 0.0
      %v463 = vmax.f32 %v413, 0.0
      %v464 = vmax.f32 %v416, 0.0
      %v465 = vmax.f32 %v419, 0.0
      %v466 = vmax.f32 %v422, 0.0
      %v467 = vmax.f32 %v425, 0.0
      %v468 = vmax.f32 %v428, 0.0
      %v469 = vmax.f32 %v431, 0.0
      %v470 = vmax.f32 %v434, 0.0
      %v471 = vmax.f32 %v437, 0.0
      %v472 = vmax.f32 %v440, 0.0
      %v473 = vmax.f32 %v443, 0.0
      %v474 = vmax.f32 %v446, 0.0
      %v475 = vmax.f32 %v449, 0.0
      %v476 = vmax.f32 %v308, %v451
      %v477 = vmax.f32 %v309, %v452
      %v478 = vmax.f32 %v310, %v453
      %v479 = vmax.f32 %v311, %v454
      %v480 = vmax.f32 %v312, %v455
      %v481 = vmax.f32 %v313, %v456
      %v482 = vmax.f32 %v314, %v457
      %v483 = vmax.f32 %v315, %v458
      %v484 = vmax.f32 %v316, %v459
      %v485 = vmax.f32 %v317, %v460
      %v486 = vmax.f32 %v318, %v461
      %v487 = vmax.f32 %v319, %v462
      %v488 = vmax.f32 %v320, %v463
      %v489 = vmax.f32 %v321, %v464
      %v490 = vmax.f32 %v322, %v465
      %v491 = vmax.f32 %v323, %v466
      %v492 = vmax.f32 %v324, %v467
      %v493 = vmax.f32 %v325, %v468
      %v494 = vmax.f32 %v326, %v469
      %v495 = vmax.f32 %v327, %v470
      %v496 = vmax.f32 %v328, %v471
      %v497 = vmax.f32 %v329, %v472
      %v498 = vmax.f32 %v330, %v473
      %v499 = vmax.f32 %v331, %v474
      %v500 = vmax.f32 %v332, %v475
      %s501 = scalar_lea.vmem %s165, 400
      %v502 = vld [vmem:[%s501] sm:$0xff]
      %v503 = vld [vmem:[%s501 + $0x8] sm:$0xff]
      %v504 = vld [vmem:[%s501 + $0x10] sm:$0xff]
      %v505 = vld [vmem:[%s501 + $0x18] sm:$0xff]
      %v506 = vld [vmem:[%s501 + $0x20] sm:$0xff]
      %v507 = vld [vmem:[%s501 + $0x28] sm:$0xff]
      %v508 = vld [vmem:[%s501 + $0x30] sm:$0xff]
      %v509 = vld [vmem:[%s501 + $0x38] sm:$0xff]
      %v510 = vld [vmem:[%s501 + $0x40] sm:$0xff]
      %v511 = vld [vmem:[%s501 + $0x48] sm:$0xff]
      %v512 = vld [vmem:[%s501 + $0x50] sm:$0xff]
      %v513 = vld [vmem:[%s501 + $0x58] sm:$0xff]
      %v514 = vld [vmem:[%s501 + $0x60] sm:$0xff]
      %v515 = vld [vmem:[%s501 + $0x68] sm:$0xff]
      %v516 = vld [vmem:[%s501 + $0x70] sm:$0xff]
      %v517 = vld [vmem:[%s501 + $0x78] sm:$0xff]
      %v518 = vld [vmem:[%s501 + $0x80] sm:$0xff]
      %v519 = vld [vmem:[%s501 + $0x88] sm:$0xff]
      %v520 = vld [vmem:[%s501 + $0x90] sm:$0xff]
      %v521 = vld [vmem:[%s501 + $0x98] sm:$0xff]
      %v522 = vld [vmem:[%s501 + $0xa0] sm:$0xff]
      %v523 = vld [vmem:[%s501 + $0xa8] sm:$0xff]
      %v524 = vld [vmem:[%s501 + $0xb0] sm:$0xff]
      %v525 = vld [vmem:[%s501 + $0xb8] sm:$0xff]
      %v526 = vld [vmem:[%s501 + $0xc0] sm:$0xf]
      %527 = vmatpush.msra.mxu0 %v186
      %528 = vmatpush.msra.mxu0 %v185
      %529 = vmatpush.msra.mxu0 %v184
      %530 = vmatpush.msra.mxu0 %v183
      %531 = vmatpush.msra.mxu0 %v182
      %532 = vmatpush.msra.mxu0 %v181
      %533 = vmatpush.msra.mxu0 %v180
      %534 = vmatpush.msra.mxu0 %v179
      %535 = vmatpush.msra.mxu0 %v178
      %536 = vmatpush.msra.mxu0 %v177
      %537 = vmatpush.msra.mxu0 %v176
      %538 = vmatpush.msra.mxu0 %v175
      %539 = vmatpush.msra.mxu0 %v174
      %540 = vmatpush.msra.mxu0 %v173
      %541 = vmatpush.msra.mxu0 %v172
      %542 = vmatpush.msra.mxu0 %v171
      %543 = vmatmul.f32.gmra.mxu0 %v502
      %v544 = vpop.f32.mrf.mxu0
      %v545 = vadd.f32 %v214, %v544
      %546 = vmatmul.f32.gmra.mxu0 %v503
      %v547 = vpop.f32.mrf.mxu0
      %v548 = vadd.f32 %v214, %v547
      %549 = vmatmul.f32.gmra.mxu0 %v504
      %v550 = vpop.f32.mrf.mxu0
      %v551 = vadd.f32 %v214, %v550
      %552 = vmatmul.f32.gmra.mxu0 %v505
      %v553 = vpop.f32.mrf.mxu0
      %v554 = vadd.f32 %v214, %v553
      %555 = vmatmul.f32.gmra.mxu0 %v506
      %v556 = vpop.f32.mrf.mxu0
      %v557 = vadd.f32 %v214, %v556
      %558 = vmatmul.f32.gmra.mxu0 %v507
      %v559 = vpop.f32.mrf.mxu0
      %v560 = vadd.f32 %v214, %v559
      %561 = vmatmul.f32.gmra.mxu0 %v508
      %v562 = vpop.f32.mrf.mxu0
      %v563 = vadd.f32 %v214, %v562
      %564 = vmatmul.f32.gmra.mxu0 %v509
      %v565 = vpop.f32.mrf.mxu0
      %v566 = vadd.f32 %v214, %v565
      %567 = vmatmul.f32.gmra.mxu0 %v510
      %v568 = vpop.f32.mrf.mxu0
      %v569 = vadd.f32 %v214, %v568
      %570 = vmatmul.f32.gmra.mxu0 %v511
      %v571 = vpop.f32.mrf.mxu0
      %v572 = vadd.f32 %v214, %v571
      %573 = vmatmul.f32.gmra.mxu0 %v512
      %v574 = vpop.f32.mrf.mxu0
      %v575 = vadd.f32 %v214, %v574
      %576 = vmatmul.f32.gmra.mxu0 %v513
      %v577 = vpop.f32.mrf.mxu0
      %v578 = vadd.f32 %v214, %v577
      %579 = vmatmul.f32.gmra.mxu0 %v514
      %v580 = vpop.f32.mrf.mxu0
      %v581 = vadd.f32 %v214, %v580
      %582 = vmatmul.f32.gmra.mxu0 %v515
      %v583 = vpop.f32.mrf.mxu0
      %v584 = vadd.f32 %v214, %v583
      %585 = vmatmul.f32.gmra.mxu0 %v516
      %v586 = vpop.f32.mrf.mxu0
      %v587 = vadd.f32 %v214, %v586
      %588 = vmatmul.f32.gmra.mxu0 %v517
      %v589 = vpop.f32.mrf.mxu0
      %v590 = vadd.f32 %v214, %v589
      %591 = vmatmul.f32.gmra.mxu0 %v518
      %v592 = vpop.f32.mrf.mxu0
      %v593 = vadd.f32 %v214, %v592
      %594 = vmatmul.f32.gmra.mxu0 %v519
      %v595 = vpop.f32.mrf.mxu0
      %v596 = vadd.f32 %v214, %v595
      %597 = vmatmul.f32.gmra.mxu0 %v520
      %v598 = vpop.f32.mrf.mxu0
      %v599 = vadd.f32 %v214, %v598
      %600 = vmatmul.f32.gmra.mxu0 %v521
      %v601 = vpop.f32.mrf.mxu0
      %v602 = vadd.f32 %v214, %v601
      %603 = vmatmul.f32.gmra.mxu0 %v522
      %v604 = vpop.f32.mrf.mxu0
      %v605 = vadd.f32 %v214, %v604
      %606 = vmatmul.f32.gmra.mxu0 %v523
      %v607 = vpop.f32.mrf.mxu0
      %v608 = vadd.f32 %v214, %v607
      %609 = vmatmul.f32.gmra.mxu0 %v524
      %v610 = vpop.f32.mrf.mxu0
      %v611 = vadd.f32 %v214, %v610
      %612 = vmatmul.f32.gmra.mxu0 %v525
      %v613 = vpop.f32.mrf.mxu0
      %v614 = vadd.f32 %v214, %v613
      %615 = vmatmul.f32.gmra.mxu0 %v526
      %v616 = vpop.f32.mrf.mxu0
      %v617 = vadd.f32 %v214, %v616
      %618 = vdwg.mxu0
      %v619 = vmax.f32 %v545, 0.0
      %v620 = vmax.f32 %v548, 0.0
      %v621 = vmax.f32 %v551, 0.0
      %v622 = vmax.f32 %v554, 0.0
      %v623 = vmax.f32 %v557, 0.0
      %v624 = vmax.f32 %v560, 0.0
      %v625 = vmax.f32 %v563, 0.0
      %v626 = vmax.f32 %v566, 0.0
      %v627 = vmax.f32 %v569, 0.0
      %v628 = vmax.f32 %v572, 0.0
      %v629 = vmax.f32 %v575, 0.0
      %v630 = vmax.f32 %v578, 0.0
      %v631 = vmax.f32 %v581, 0.0
      %v632 = vmax.f32 %v584, 0.0
      %v633 = vmax.f32 %v587, 0.0
      %v634 = vmax.f32 %v590, 0.0
      %v635 = vmax.f32 %v593, 0.0
      %v636 = vmax.f32 %v596, 0.0
      %v637 = vmax.f32 %v599, 0.0
      %v638 = vmax.f32 %v602, 0.0
      %v639 = vmax.f32 %v605, 0.0
      %v640 = vmax.f32 %v608, 0.0
      %v641 = vmax.f32 %v611, 0.0
      %v642 = vmax.f32 %v614, 0.0
      %v643 = vmax.f32 %v617, 0.0
      %v644 = vmax.f32 %v476, %v619
      %v645 = vmax.f32 %v477, %v620
      %v646 = vmax.f32 %v478, %v621
      %v647 = vmax.f32 %v479, %v622
      %v648 = vmax.f32 %v480, %v623
      %v649 = vmax.f32 %v481, %v624
      %v650 = vmax.f32 %v482, %v625
      %v651 = vmax.f32 %v483, %v626
      %v652 = vmax.f32 %v484, %v627
      %v653 = vmax.f32 %v485, %v628
      %v654 = vmax.f32 %v486, %v629
      %v655 = vmax.f32 %v487, %v630
      %v656 = vmax.f32 %v488, %v631
      %v657 = vmax.f32 %v489, %v632
      %v658 = vmax.f32 %v490, %v633
      %v659 = vmax.f32 %v491, %v634
      %v660 = vmax.f32 %v492, %v635
      %v661 = vmax.f32 %v493, %v636
      %v662 = vmax.f32 %v494, %v637
      %v663 = vmax.f32 %v495, %v638
      %v664 = vmax.f32 %v496, %v639
      %v665 = vmax.f32 %v497, %v640
      %v666 = vmax.f32 %v498, %v641
      %v667 = vmax.f32 %v499, %v642
      %v668 = vmax.f32 %v500, %v643
      %s669 = scalar_lea.vmem %s165, 600
      %v670 = vld [vmem:[%s669] sm:$0xff]
      %v671 = vld [vmem:[%s669 + $0x8] sm:$0xff]
      %v672 = vld [vmem:[%s669 + $0x10] sm:$0xff]
      %v673 = vld [vmem:[%s669 + $0x18] sm:$0xff]
      %v674 = vld [vmem:[%s669 + $0x20] sm:$0xff]
      %v675 = vld [vmem:[%s669 + $0x28] sm:$0xff]
      %v676 = vld [vmem:[%s669 + $0x30] sm:$0xff]
      %v677 = vld [vmem:[%s669 + $0x38] sm:$0xff]
      %v678 = vld [vmem:[%s669 + $0x40] sm:$0xff]
      %v679 = vld [vmem:[%s669 + $0x48] sm:$0xff]
      %v680 = vld [vmem:[%s669 + $0x50] sm:$0xff]
      %v681 = vld [vmem:[%s669 + $0x58] sm:$0xff]
      %v682 = vld [vmem:[%s669 + $0x60] sm:$0xff]
      %v683 = vld [vmem:[%s669 + $0x68] sm:$0xff]
      %v684 = vld [vmem:[%s669 + $0x70] sm:$0xff]
      %v685 = vld [vmem:[%s669 + $0x78] sm:$0xff]
      %v686 = vld [vmem:[%s669 + $0x80] sm:$0xff]
      %v687 = vld [vmem:[%s669 + $0x88] sm:$0xff]
      %v688 = vld [vmem:[%s669 + $0x90] sm:$0xff]
      %v689 = vld [vmem:[%s669 + $0x98] sm:$0xff]
      %v690 = vld [vmem:[%s669 + $0xa0] sm:$0xff]
      %v691 = vld [vmem:[%s669 + $0xa8] sm:$0xff]
      %v692 = vld [vmem:[%s669 + $0xb0] sm:$0xff]
      %v693 = vld [vmem:[%s669 + $0xb8] sm:$0xff]
      %v694 = vld [vmem:[%s669 + $0xc0] sm:$0xf]
      %695 = vmatpush.msra.mxu0 %v186
      %696 = vmatpush.msra.mxu0 %v185
      %697 = vmatpush.msra.mxu0 %v184
      %698 = vmatpush.msra.mxu0 %v183
      %699 = vmatpush.msra.mxu0 %v182
      %700 = vmatpush.msra.mxu0 %v181
      %701 = vmatpush.msra.mxu0 %v180
      %702 = vmatpush.msra.mxu0 %v179
      %703 = vmatpush.msra.mxu0 %v178
      %704 = vmatpush.msra.mxu0 %v177
      %705 = vmatpush.msra.mxu0 %v176
      %706 = vmatpush.msra.mxu0 %v175
      %707 = vmatpush.msra.mxu0 %v174
      %708 = vmatpush.msra.mxu0 %v173
      %709 = vmatpush.msra.mxu0 %v172
      %710 = vmatpush.msra.mxu0 %v171
      %711 = vmatmul.f32.gmra.mxu0 %v670
      %v712 = vpop.f32.mrf.mxu0
      %v713 = vadd.f32 %v214, %v712
      %714 = vmatmul.f32.gmra.mxu0 %v671
      %v715 = vpop.f32.mrf.mxu0
      %v716 = vadd.f32 %v214, %v715
      %717 = vmatmul.f32.gmra.mxu0 %v672
      %v718 = vpop.f32.mrf.mxu0
      %v719 = vadd.f32 %v214, %v718
      %720 = vmatmul.f32.gmra.mxu0 %v673
      %v721 = vpop.f32.mrf.mxu0
      %v722 = vadd.f32 %v214, %v721
      %723 = vmatmul.f32.gmra.mxu0 %v674
      %v724 = vpop.f32.mrf.mxu0
      %v725 = vadd.f32 %v214, %v724
      %726 = vmatmul.f32.gmra.mxu0 %v675
      %v727 = vpop.f32.mrf.mxu0
      %v728 = vadd.f32 %v214, %v727
      %729 = vmatmul.f32.gmra.mxu0 %v676
      %v730 = vpop.f32.mrf.mxu0
      %v731 = vadd.f32 %v214, %v730
      %732 = vmatmul.f32.gmra.mxu0 %v677
      %v733 = vpop.f32.mrf.mxu0
      %v734 = vadd.f32 %v214, %v733
      %735 = vmatmul.f32.gmra.mxu0 %v678
      %v736 = vpop.f32.mrf.mxu0
      %v737 = vadd.f32 %v214, %v736
      %738 = vmatmul.f32.gmra.mxu0 %v679
      %v739 = vpop.f32.mrf.mxu0
      %v740 = vadd.f32 %v214, %v739
      %741 = vmatmul.f32.gmra.mxu0 %v680
      %v742 = vpop.f32.mrf.mxu0
      %v743 = vadd.f32 %v214, %v742
      %744 = vmatmul.f32.gmra.mxu0 %v681
      %v745 = vpop.f32.mrf.mxu0
      %v746 = vadd.f32 %v214, %v745
      %747 = vmatmul.f32.gmra.mxu0 %v682
      %v748 = vpop.f32.mrf.mxu0
      %v749 = vadd.f32 %v214, %v748
      %750 = vmatmul.f32.gmra.mxu0 %v683
      %v751 = vpop.f32.mrf.mxu0
      %v752 = vadd.f32 %v214, %v751
      %753 = vmatmul.f32.gmra.mxu0 %v684
      %v754 = vpop.f32.mrf.mxu0
      %v755 = vadd.f32 %v214, %v754
      %756 = vmatmul.f32.gmra.mxu0 %v685
      %v757 = vpop.f32.mrf.mxu0
      %v758 = vadd.f32 %v214, %v757
      %759 = vmatmul.f32.gmra.mxu0 %v686
      %v760 = vpop.f32.mrf.mxu0
      %v761 = vadd.f32 %v214, %v760
      %762 = vmatmul.f32.gmra.mxu0 %v687
      %v763 = vpop.f32.mrf.mxu0
      %v764 = vadd.f32 %v214, %v763
      %765 = vmatmul.f32.gmra.mxu0 %v688
      %v766 = vpop.f32.mrf.mxu0
      %v767 = vadd.f32 %v214, %v766
      %768 = vmatmul.f32.gmra.mxu0 %v689
      %v769 = vpop.f32.mrf.mxu0
      %v770 = vadd.f32 %v214, %v769
      %771 = vmatmul.f32.gmra.mxu0 %v690
      %v772 = vpop.f32.mrf.mxu0
      %v773 = vadd.f32 %v214, %v772
      %774 = vmatmul.f32.gmra.mxu0 %v691
      %v775 = vpop.f32.mrf.mxu0
      %v776 = vadd.f32 %v214, %v775
      %777 = vmatmul.f32.gmra.mxu0 %v692
      %v778 = vpop.f32.mrf.mxu0
      %v779 = vadd.f32 %v214, %v778
      %780 = vmatmul.f32.gmra.mxu0 %v693
      %v781 = vpop.f32.mrf.mxu0
      %v782 = vadd.f32 %v214, %v781
      %783 = vmatmul.f32.gmra.mxu0 %v694
      %v784 = vpop.f32.mrf.mxu0
      %v785 = vadd.f32 %v214, %v784
      %786 = vdwg.mxu0
      %v787 = vmax.f32 %v713, 0.0
      %v788 = vmax.f32 %v716, 0.0
      %v789 = vmax.f32 %v719, 0.0
      %v790 = vmax.f32 %v722, 0.0
      %v791 = vmax.f32 %v725, 0.0
      %v792 = vmax.f32 %v728, 0.0
      %v793 = vmax.f32 %v731, 0.0
      %v794 = vmax.f32 %v734, 0.0
      %v795 = vmax.f32 %v737, 0.0
      %v796 = vmax.f32 %v740, 0.0
      %v797 = vmax.f32 %v743, 0.0
      %v798 = vmax.f32 %v746, 0.0
      %v799 = vmax.f32 %v749, 0.0
      %v800 = vmax.f32 %v752, 0.0
      %v801 = vmax.f32 %v755, 0.0
      %v802 = vmax.f32 %v758, 0.0
      %v803 = vmax.f32 %v761, 0.0
      %v804 = vmax.f32 %v764, 0.0
      %v805 = vmax.f32 %v767, 0.0
      %v806 = vmax.f32 %v770, 0.0
      %v807 = vmax.f32 %v773, 0.0
      %v808 = vmax.f32 %v776, 0.0
      %v809 = vmax.f32 %v779, 0.0
      %v810 = vmax.f32 %v782, 0.0
      %v811 = vmax.f32 %v785, 0.0
      %v812 = vmax.f32 %v644, %v787
      %v813 = vmax.f32 %v645, %v788
      %v814 = vmax.f32 %v646, %v789
      %v815 = vmax.f32 %v647, %v790
      %v816 = vmax.f32 %v648, %v791
      %v817 = vmax.f32 %v649, %v792
      %v818 = vmax.f32 %v650, %v793
      %v819 = vmax.f32 %v651, %v794
      %v820 = vmax.f32 %v652, %v795
      %v821 = vmax.f32 %v653, %v796
      %v822 = vmax.f32 %v654, %v797
      %v823 = vmax.f32 %v655, %v798
      %v824 = vmax.f32 %v656, %v799
      %v825 = vmax.f32 %v657, %v800
      %v826 = vmax.f32 %v658, %v801
      %v827 = vmax.f32 %v659, %v802
      %v828 = vmax.f32 %v660, %v803
      %v829 = vmax.f32 %v661, %v804
      %v830 = vmax.f32 %v662, %v805
      %v831 = vmax.f32 %v663, %v806
      %v832 = vmax.f32 %v664, %v807
      %v833 = vmax.f32 %v665, %v808
      %v834 = vmax.f32 %v666, %v809
      %v835 = vmax.f32 %v667, %v810
      %v836 = vmax.f32 %v668, %v811
      %837 = vst [vmem:[%s170] sm:$0xff] %v812
      %838 = vst [vmem:[%s170 + $0x8] sm:$0xff] %v813
      %839 = vst [vmem:[%s170 + $0x10] sm:$0xff] %v814
      %840 = vst [vmem:[%s170 + $0x18] sm:$0xff] %v815
      %841 = vst [vmem:[%s170 + $0x20] sm:$0xff] %v816
      %842 = vst [vmem:[%s170 + $0x28] sm:$0xff] %v817
      %843 = vst [vmem:[%s170 + $0x30] sm:$0xff] %v818
      %844 = vst [vmem:[%s170 + $0x38] sm:$0xff] %v819
      %845 = vst [vmem:[%s170 + $0x40] sm:$0xff] %v820
      %846 = vst [vmem:[%s170 + $0x48] sm:$0xff] %v821
      %847 = vst [vmem:[%s170 + $0x50] sm:$0xff] %v822
      %848 = vst [vmem:[%s170 + $0x58] sm:$0xff] %v823
      %849 = vst [vmem:[%s170 + $0x60] sm:$0xff] %v824
      %850 = vst [vmem:[%s170 + $0x68] sm:$0xff] %v825
      %851 = vst [vmem:[%s170 + $0x70] sm:$0xff] %v826
      %852 = vst [vmem:[%s170 + $0x78] sm:$0xff] %v827
      %853 = vst [vmem:[%s170 + $0x80] sm:$0xff] %v828
      %854 = vst [vmem:[%s170 + $0x88] sm:$0xff] %v829
      %855 = vst [vmem:[%s170 + $0x90] sm:$0xff] %v830
      %856 = vst [vmem:[%s170 + $0x98] sm:$0xff] %v831
      %857 = vst [vmem:[%s170 + $0xa0] sm:$0xff] %v832
      %858 = vst [vmem:[%s170 + $0xa8] sm:$0xff] %v833
      %859 = vst [vmem:[%s170 + $0xb0] sm:$0xff] %v834
      %860 = vst [vmem:[%s170 + $0xb8] sm:$0xff] %v835
      %861 = vst [vmem:[%s170 + $0xc0] sm:$0xf] %v836
      %p862 = scmp.lt.s32.totalorder %s14, 1
      %s863 = scalar_select %p862, %s14, 1
      %s864 = smul.addr %s863, 25
      %s865 = smul.addr %s864, 8
      %s866 = scalar_lea.vmem %s3, %s865
      // Predicated region
      $region33: #{net_forward.3} parent=31 // pred_check
        %p867 = pneg %p100
      $region34: #{net_forward.3} parent=31 // pred_check_branch
        %869 = sbr.rel (%p867) target = $region36
      $region35: #{net_forward.3} parent=31 // pred_region
        _
      $region36: #{net_forward.3} parent=31 // pred_fallthru
        _
    $region32: #{net_forward.3} parent=5 // pred_fallthru
      _
    %p870 = scmp.le.s32.totalorder 2, %s9
    // Predicated region
    $region37: #{net_forward.3} parent=5 // pred_check
      %p871 = pneg %p870
    $region38: #{net_forward.3} parent=5 // pred_check_branch
      %873 = sbr.rel (%p871) target = $region40
    $region39: #{net_forward.3} parent=5 // pred_region
      %s874 = ssub.s32 %s9, 2
      // Predicated region
      $region41: #{net_forward.3} parent=39 // pred_check
        %p875 = pneg %p106
      $region42: #{net_forward.3} parent=39 // pred_check_branch
        %877 = sbr.rel (%p875) target = $region44
      $region43: #{net_forward.3} parent=39 // pred_region
        %p878 = scmp.lt.s32.totalorder %s15, 1
        %s879 = scalar_select %p878, %s15, 1
        %s880 = smul.addr %s879, 25
        %s881 = smul.addr %s880, 8
        %s882 = scalar_lea.vmem %s3, %s881
      $region44: #{net_forward.3} parent=39 // pred_fallthru
        _
    $region40: #{net_forward.3} parent=5 // pred_fallthru
      _
  $region6: #{net_forward.3} parent=0 // loop_footer
    %s13 = sadd.s32 1, %s9
  $region7: #{net_forward.3} parent=0 // loop_footer_branch
    %8 = sbr.rel target = $region3
  $region8: #{net_forward.3} parent=0 // loop_exit
    _

// kernel: net_forward.4
$region0: #{net_forward.4}
  #allocation0 [shape = 'u32[]', space=smem, size = 0x4, offset = 0x4, fixed_abs, tag = 'smem constant byte address 0x4 - core index']
  #allocation1 [shape = 'u32[72,128]{1,0:T(1,128)}', space=vmem, size = 0x9000, scoped, tag = 'internal scratch']
  %s0 = inlined_call_operand.vmem [shape: f32[2,4,25,256], index: 0, kind: input, shape index: {}]
  %s1 = inlined_call_operand.vmem [shape: f32[256,128], index: 1, kind: input, shape index: {}]
  %s2 = inlined_call_operand.vmem [shape: f32[1,128], index: 2, kind: input, shape index: {}]
  %s3 = inlined_call_operand.vmem [shape: f32[2,25,128], index: 3, kind: output, shape index: {}]
  %s4 = sld [smem:[#allocation0]]
  $region45: #{net_forward.4} parent=0
    _
  %s6 = ssub.s32 1, %s4
  %s7 = scalar_select 0, %s6, %s4
  loop: start=0, step=1, limit=4
  $region2: #{net_forward.4} parent=0 // loop_pre_header
    _
  $region3: #{net_forward.4} parent=0 // loop_header
    %s9 = sphi 0, %s13
    %p10 = scmp.ge.s32.totalorder %s9, 4
    %s19 = sphi 0, %s21
    %s22 = sphi 0, %s19
    %s23 = sphi 0, %s22
    %s39 = sphi 0, %s23
    %s43 = sphi 0, %s43
    %s45 = sphi 0, %s43
    %s46 = sphi 0, %s45
    %s60 = sphi 0, %s46
    %s64 = sphi 0, %s64
    %s66 = sphi 0, %s64
    %s67 = sphi 0, %s66
    %s81 = sphi 0, %s67
    %s87 = sphi 0, %s89
    %s90 = sphi 0, %s87
    %s91 = sphi 0, %s90
    %s107 = sphi 0, %s91
  $region4: #{net_forward.4} parent=0 // loop_header_branch
    %12 = sbr.rel (%p10) target = $region8
  $region5: #{net_forward.4} parent=0 // loop_body
    %s14 = ssub.s32 %s9, 1
    %s15 = ssub.s32 %s9, 2
    %s16 = sadd.s32 %s9, 1
    %s17 = ssub.s32 %s9, %s16
    %p18 = scmp.eq.s32.totalorder %s17, 0
    %s20 = sadd.s32 %s19, 1
    %s21 = scalar_select %p18, %s19, %s20
    %p24 = pneg %p18
    %p25 = scmp.eq.s32.totalorder %s9, 1
    %p26 = por %p24, %p25
    %p27 = scmp.ne.s32.totalorder %s19, %s22
    %p28 = scmp.eq.s32.totalorder %s9, 0
    %p29 = por %p27, %p28
    %p30 = scmp.ne.s32.totalorder %s19, %s22
    %p31 = scmp.eq.s32.totalorder %s14, 1
    %p32 = por %p30, %p31
    %p33 = scmp.ne.s32.totalorder %s22, %s23
    %p34 = scmp.eq.s32.totalorder %s14, 0
    %p35 = por %p33, %p34
    %p36 = scmp.ne.s32.totalorder %s22, %s23
    %p37 = scmp.eq.s32.totalorder %s15, 1
    %p38 = por %p36, %p37
    %p40 = scmp.ne.s32.totalorder %s23, %s39
    %p41 = scmp.eq.s32.totalorder %s15, 0
    %p42 = por %p40, %p41
    %s44 = sadd.s32 %s43, 1
    %p47 = scmp.eq.s32.totalorder %s9, 1
    %p48 = scmp.ne.s32.totalorder %s43, %s45
    %p49 = scmp.eq.s32.totalorder %s9, 0
    %p50 = por %p48, %p49
    %p51 = scmp.ne.s32.totalorder %s43, %s45
    %p52 = scmp.eq.s32.totalorder %s14, 1
    %p53 = por %p51, %p52
    %p54 = scmp.ne.s32.totalorder %s45, %s46
    %p55 = scmp.eq.s32.totalorder %s14, 0
    %p56 = por %p54, %p55
    %p57 = scmp.ne.s32.totalorder %s45, %s46
    %p58 = scmp.eq.s32.totalorder %s15, 1
    %p59 = por %p57, %p58
    %p61 = scmp.ne.s32.totalorder %s46, %s60
    %p62 = scmp.eq.s32.totalorder %s15, 0
    %p63 = por %p61, %p62
    %s65 = sadd.s32 %s64, 1
    %p68 = scmp.eq.s32.totalorder %s9, 1
    %p69 = scmp.ne.s32.totalorder %s64, %s66
    %p70 = scmp.eq.s32.totalorder %s9, 0
    %p71 = por %p69, %p70
    %p72 = scmp.ne.s32.totalorder %s64, %s66
    %p73 = scmp.eq.s32.totalorder %s14, 1
    %p74 = por %p72, %p73
    %p75 = scmp.ne.s32.totalorder %s66, %s67
    %p76 = scmp.eq.s32.totalorder %s14, 0
    %p77 = por %p75, %p76
    %p78 = scmp.ne.s32.totalorder %s66, %s67
    %p79 = scmp.eq.s32.totalorder %s15, 1
    %p80 = por %p78, %p79
    %p82 = scmp.ne.s32.totalorder %s67, %s81
    %p83 = scmp.eq.s32.totalorder %s15, 0
    %p84 = por %p82, %p83
    %s85 = ssub.s32 %s9, %s16
    %p86 = scmp.eq.s32.totalorder %s85, 0
    %s88 = sadd.s32 %s87, 1
    %s89 = scalar_select %p86, %s87, %s88
    %p92 = pneg %p86
    %p93 = scmp.eq.s32.totalorder %s9, 1
    %p94 = por %p92, %p93
    %p95 = scmp.ne.s32.totalorder %s87, %s90
    %p96 = scmp.eq.s32.totalorder %s9, 0
    %p97 = por %p95, %p96
    %p98 = scmp.ne.s32.totalorder %s87, %s90
    %p99 = scmp.eq.s32.totalorder %s14, 1
    %p100 = por %p98, %p99
    %p101 = scmp.ne.s32.totalorder %s90, %s91
    %p102 = scmp.eq.s32.totalorder %s14, 0
    %p103 = por %p101, %p102
    %p104 = scmp.ne.s32.totalorder %s90, %s91
    %p105 = scmp.eq.s32.totalorder %s15, 1
    %p106 = por %p104, %p105
    %p108 = scmp.ne.s32.totalorder %s91, %s107
    %p109 = scmp.eq.s32.totalorder %s15, 0
    %p110 = por %p108, %p109
    %p111 = scmp.le.s32.totalorder 1, %s9
    %p112 = scmp.lt.s32.totalorder %s9, 3
    %p113 = pnand %p111, %p112
    %p114 = pneg %p113
    // Predicated region
    $region9: #{net_forward.4} parent=5 // pred_check
      _
    $region10: #{net_forward.4} parent=5 // pred_check_branch
      %116 = sbr.rel (%p113) target = $region12
    $region11: #{net_forward.4} parent=5 // pred_region
      %s117 = ssub.s32 %s9, 1
      // Predicated region
      $region13: #{net_forward.4} parent=11 // pred_check
        %p118 = pneg %p56
      $region14: #{net_forward.4} parent=11 // pred_check_branch
        %120 = sbr.rel (%p118) target = $region16
      $region15: #{net_forward.4} parent=11 // pred_region
        _
      $region16: #{net_forward.4} parent=11 // pred_fallthru
        _
      // Predicated region
      $region17: #{net_forward.4} parent=11 // pred_check
        %p121 = pneg %p77
      $region18: #{net_forward.4} parent=11 // pred_check_branch
        %123 = sbr.rel (%p121) target = $region20
      $region19: #{net_forward.4} parent=11 // pred_region
        _
      $region20: #{net_forward.4} parent=11 // pred_fallthru
        _
    $region12: #{net_forward.4} parent=5 // pred_fallthru
      _
    %p124 = scmp.lt.s32.totalorder %s9, 2
    // Predicated region
    $region21: #{net_forward.4} parent=5 // pred_check
      %p125 = pneg %p124
    $region22: #{net_forward.4} parent=5 // pred_check_branch
      %127 = sbr.rel (%p125) target = $region24
    $region23: #{net_forward.4} parent=5 // pred_region
      // Predicated region
      $region25: #{net_forward.4} parent=23 // pred_check
        %p128 = pneg %p29
      $region26: #{net_forward.4} parent=23 // pred_check_branch
        %130 = sbr.rel (%p128) target = $region28
      $region27: #{net_forward.4} parent=23 // pred_region
        %p131 = scmp.lt.s32.totalorder %s9, 1
        %s132 = scalar_select %p131, %s9, 1
        %s133 = smul.addr %s132, 32
        %s134 = smul.addr %s133, 8
        %s135 = scalar_lea.vmem %s0, %s134
      $region28: #{net_forward.4} parent=23 // pred_fallthru
        _
    $region24: #{net_forward.4} parent=5 // pred_fallthru
      _
    %p136 = scmp.le.s32.totalorder 1, %s9
    %p137 = scmp.lt.s32.totalorder %s9, 3
    %p138 = pnand %p136, %p137
    %p139 = pneg %p138
    // Predicated region
    $region29: #{net_forward.4} parent=5 // pred_check
      _
    $region30: #{net_forward.4} parent=5 // pred_check_branch
      %141 = sbr.rel (%p138) target = $region32
    $region31: #{net_forward.4} parent=5 // pred_region
      %s142 = ssub.s32 %s9, 1
      %p143 = scmp.lt.s32.totalorder %s14, 1
      %s144 = scalar_select %p143, %s14, 1
      %s145 = smul.addr %s144, 32
      %s146 = smul.addr %s145, 8
      %s147 = scalar_lea.vmem %s0, %s146
      %p148 = pneg %p35
      %p149 = pneg %p32
      %p150 = pneg %p56
      %p151 = pneg %p53
      %p152 = pneg %p77
      %p153 = pneg %p74
      %p154 = pneg %p103
      %p155 = pneg %p100
      %p156 = scmp.lt.s32.totalorder %s14, 1
      %s157 = scalar_select %p156, %s14, 1
      %s158 = smul.addr %s157, 4
      %s159 = smul.addr %s158, 8
      %s160 = scalar_lea.vmem %s3, %s159
      %p161 = scmp.lt.s32.totalorder %s14, 1
      %s162 = scalar_select %p161, %s14, 1
      %s163 = smul.addr %s162, 32
      %s164 = smul.addr %s163, 8
      %s165 = scalar_lea.vmem %s0, %s164
      %p166 = scmp.lt.s32.totalorder %s14, 1
      %s167 = scalar_select %p166, %s14, 1
      %s168 = smul.addr %s167, 4
      %s169 = smul.addr %s168, 8
      %s170 = scalar_lea.vmem %s3, %s169
      %v171 = vld [vmem:[%s1] sm:$0xff]
      %v172 = vld [vmem:[%s1 + $0x8] sm:$0xff]
      %v173 = vld [vmem:[%s1 + $0x10] sm:$0xff]
      %v174 = vld [vmem:[%s1 + $0x18] sm:$0xff]
      %v175 = vld [vmem:[%s1 + $0x20] sm:$0xff]
      %v176 = vld [vmem:[%s1 + $0x28] sm:$0xff]
      %v177 = vld [vmem:[%s1 + $0x30] sm:$0xff]
      %v178 = vld [vmem:[%s1 + $0x38] sm:$0xff]
      %v179 = vld [vmem:[%s1 + $0x40] sm:$0xff]
      %v180 = vld [vmem:[%s1 + $0x48] sm:$0xff]
      %v181 = vld [vmem:[%s1 + $0x50] sm:$0xff]
      %v182 = vld [vmem:[%s1 + $0x58] sm:$0xff]
      %v183 = vld [vmem:[%s1 + $0x60] sm:$0xff]
      %v184 = vld [vmem:[%s1 + $0x68] sm:$0xff]
      %v185 = vld [vmem:[%s1 + $0x70] sm:$0xff]
      %v186 = vld [vmem:[%s1 + $0x78] sm:$0xff]
      %v187 = vld [vmem:[%s1 + $0x80] sm:$0xff]
      %v188 = vld [vmem:[%s1 + $0x88] sm:$0xff]
      %v189 = vld [vmem:[%s1 + $0x90] sm:$0xff]
      %v190 = vld [vmem:[%s1 + $0x98] sm:$0xff]
      %v191 = vld [vmem:[%s1 + $0xa0] sm:$0xff]
      %v192 = vld [vmem:[%s1 + $0xa8] sm:$0xff]
      %v193 = vld [vmem:[%s1 + $0xb0] sm:$0xff]
      %v194 = vld [vmem:[%s1 + $0xb8] sm:$0xff]
      %v195 = vld [vmem:[%s1 + $0xc0] sm:$0xff]
      %v196 = vld [vmem:[%s1 + $0xc8] sm:$0xff]
      %v197 = vld [vmem:[%s1 + $0xd0] sm:$0xff]
      %v198 = vld [vmem:[%s1 + $0xd8] sm:$0xff]
      %v199 = vld [vmem:[%s1 + $0xe0] sm:$0xff]
      %v200 = vld [vmem:[%s1 + $0xe8] sm:$0xff]
      %v201 = vld [vmem:[%s1 + $0xf0] sm:$0xff]
      %v202 = vld [vmem:[%s1 + $0xf8] sm:$0xff]
      %v203 = vld [vmem:[%s2] sm:$0x1]
      %v204 = vld [vmem:[%s165] sm:$0xff]
      %v205 = vld [vmem:[%s165 + $0x8] sm:$0xff]
      %v206 = vld [vmem:[%s165 + $0x10] sm:$0xff]
      %v207 = vld [vmem:[%s165 + $0x18] sm:$0xff]
      %v208 = vld [vmem:[%s165 + $0x20] sm:$0xff]
      %v209 = vld [vmem:[%s165 + $0x28] sm:$0xff]
      %v210 = vld [vmem:[%s165 + $0x30] sm:$0x1]
      %v211 = vld [vmem:[%s165 + $0x38] sm:$0x1]
      %v213 = vperm.slane %v203, 0
      %215 = vmatpush.msra.mxu0 %v186
      %216 = vmatpush.msra.mxu0 %v185
      %217 = vmatpush.msra.mxu0 %v184
      %218 = vmatpush.msra.mxu0 %v183
      %219 = vmatpush.msra.mxu0 %v182
      %220 = vmatpush.msra.mxu0 %v181
      %221 = vmatpush.msra.mxu0 %v180
      %222 = vmatpush.msra.mxu0 %v179
      %223 = vmatpush.msra.mxu0 %v178
      %224 = vmatpush.msra.mxu0 %v177
      %225 = vmatpush.msra.mxu0 %v176
      %226 = vmatpush.msra.mxu0 %v175
      %227 = vmatpush.msra.mxu0 %v174
      %228 = vmatpush.msra.mxu0 %v173
      %229 = vmatpush.msra.mxu0 %v172
      %230 = vmatpush.msra.mxu0 %v171
      %231 = vmatmul.f32.gmra.mxu0 %v204
      %v232 = vpop.f32.mrf.mxu0
      %v233 = vadd.f32 %v213, %v232
      %234 = vmatmul.f32.gmra.mxu0 %v206
      %v235 = vpop.f32.mrf.mxu0
      %v236 = vadd.f32 %v213, %v235
      %237 = vmatmul.f32.gmra.mxu0 %v208
      %v238 = vpop.f32.mrf.mxu0
      %v239 = vadd.f32 %v213, %v238
      %240 = vmatmul.f32.gmra.mxu0 %v210
      %v241 = vpop.f32.mrf.mxu0
      %v242 = vadd.f32 %v213, %v241
      %243 = vdwg.mxu0
      %244 = vmatpush.msra.mxu0 %v202
      %245 = vmatpush.msra.mxu0 %v201
      %246 = vmatpush.msra.mxu0 %v200
      %247 = vmatpush.msra.mxu0 %v199
      %248 = vmatpush.msra.mxu0 %v198
      %249 = vmatpush.msra.mxu0 %v197
      %250 = vmatpush.msra.mxu0 %v196
      %251 = vmatpush.msra.mxu0 %v195
      %252 = vmatpush.msra.mxu0 %v194
      %253 = vmatpush.msra.mxu0 %v193
      %254 = vmatpush.msra.mxu0 %v192
      %255 = vmatpush.msra.mxu0 %v191
      %256 = vmatpush.msra.mxu0 %v190
      %257 = vmatpush.msra.mxu0 %v189
      %258 = vmatpush.msra.mxu0 %v188
      %259 = vmatpush.msra.mxu0 %v187
      %260 = vmatmul.f32.gmra.mxu0 %v205
      %v261 = vpop.f32.mrf.mxu0
      %v262 = vadd.f32 %v233, %v261
      %263 = vmatmul.f32.gmra.mxu0 %v207
      %v264 = vpop.f32.mrf.mxu0
      %v265 = vadd.f32 %v236, %v264
      %266 = vmatmul.f32.gmra.mxu0 %v209
      %v267 = vpop.f32.mrf.mxu0
      %v268 = vadd.f32 %v239, %v267
      %269 = vmatmul.f32.gmra.mxu0 %v211
      %v270 = vpop.f32.mrf.mxu0
      %v271 = vadd.f32 %v242, %v270
      %272 = vdwg.mxu0
      %v273 = vmax.f32 %v262, 0.0
      %v274 = vmax.f32 %v265, 0.0
      %v275 = vmax.f32 %v268, 0.0
      %v276 = vmax.f32 %v271, 0.0
      %s277 = scalar_lea.vmem %s165, 64
      %v278 = vld [vmem:[%s277] sm:$0xff]
      %v279 = vld [vmem:[%s277 + $0x8] sm:$0xff]
      %v280 = vld [vmem:[%s277 + $0x10] sm:$0xff]
      %v281 = vld [vmem:[%s277 + $0x18] sm:$0xff]
      %v282 = vld [vmem:[%s277 + $0x20] sm:$0xff]
      %v283 = vld [vmem:[%s277 + $0x28] sm:$0xff]
      %v284 = vld [vmem:[%s277 + $0x30] sm:$0x1]
      %v285 = vld [vmem:[%s277 + $0x38] sm:$0x1]
      %286 = vmatpush.msra.mxu0 %v186
      %287 = vmatpush.msra.mxu0 %v185
      %288 = vmatpush.msra.mxu0 %v184
      %289 = vmatpush.msra.mxu0 %v183
      %290 = vmatpush.msra.mxu0 %v182
      %291 = vmatpush.msra.mxu0 %v181
      %292 = vmatpush.msra.mxu0 %v180
      %293 = vmatpush.msra.mxu0 %v179
      %294 = vmatpush.msra.mxu0 %v178
      %295 = vmatpush.msra.mxu0 %v177
      %296 = vmatpush.msra.mxu0 %v176
      %297 = vmatpush.msra.mxu0 %v175
      %298 = vmatpush.msra.mxu0 %v174
      %299 = vmatpush.msra.mxu0 %v173
      %300 = vmatpush.msra.mxu0 %v172
      %301 = vmatpush.msra.mxu0 %v171
      %302 = vmatmul.f32.gmra.mxu0 %v278
      %v303 = vpop.f32.mrf.mxu0
      %v304 = vadd.f32 %v213, %v303
      %305 = vmatmul.f32.gmra.mxu0 %v280
      %v306 = vpop.f32.mrf.mxu0
      %v307 = vadd.f32 %v213, %v306
      %308 = vmatmul.f32.gmra.mxu0 %v282
      %v309 = vpop.f32.mrf.mxu0
      %v310 = vadd.f32 %v213, %v309
      %311 = vmatmul.f32.gmra.mxu0 %v284
      %v312 = vpop.f32.mrf.mxu0
      %v313 = vadd.f32 %v213, %v312
      %314 = vdwg.mxu0
      %315 = vmatpush.msra.mxu0 %v202
      %316 = vmatpush.msra.mxu0 %v201
      %317 = vmatpush.msra.mxu0 %v200
      %318 = vmatpush.msra.mxu0 %v199
      %319 = vmatpush.msra.mxu0 %v198
      %320 = vmatpush.msra.mxu0 %v197
      %321 = vmatpush.msra.mxu0 %v196
      %322 = vmatpush.msra.mxu0 %v195
      %323 = vmatpush.msra.mxu0 %v194
      %324 = vmatpush.msra.mxu0 %v193
      %325 = vmatpush.msra.mxu0 %v192
      %326 = vmatpush.msra.mxu0 %v191
      %327 = vmatpush.msra.mxu0 %v190
      %328 = vmatpush.msra.mxu0 %v189
      %329 = vmatpush.msra.mxu0 %v188
      %330 = vmatpush.msra.mxu0 %v187
      %331 = vmatmul.f32.gmra.mxu0 %v279
      %v332 = vpop.f32.mrf.mxu0
      %v333 = vadd.f32 %v304, %v332
      %334 = vmatmul.f32.gmra.mxu0 %v281
      %v335 = vpop.f32.mrf.mxu0
      %v336 = vadd.f32 %v307, %v335
      %337 = vmatmul.f32.gmra.mxu0 %v283
      %v338 = vpop.f32.mrf.mxu0
      %v339 = vadd.f32 %v310, %v338
      %340 = vmatmul.f32.gmra.mxu0 %v285
      %v341 = vpop.f32.mrf.mxu0
      %v342 = vadd.f32 %v313, %v341
      %343 = vdwg.mxu0
      %v344 = vmax.f32 %v333, 0.0
      %v345 = vmax.f32 %v336, 0.0
      %v346 = vmax.f32 %v339, 0.0
      %v347 = vmax.f32 %v342, 0.0
      %v348 = vmax.f32 %v273, %v344
      %v349 = vmax.f32 %v274, %v345
      %v350 = vmax.f32 %v275, %v346
      %v351 = vmax.f32 %v276, %v347
      %s352 = scalar_lea.vmem %s165, 128
      %v353 = vld [vmem:[%s352] sm:$0xff]
      %v354 = vld [vmem:[%s352 + $0x8] sm:$0xff]
      %v355 = vld [vmem:[%s352 + $0x10] sm:$0xff]
      %v356 = vld [vmem:[%s352 + $0x18] sm:$0xff]
      %v357 = vld [vmem:[%s352 + $0x20] sm:$0xff]
      %v358 = vld [vmem:[%s352 + $0x28] sm:$0xff]
      %v359 = vld [vmem:[%s352 + $0x30] sm:$0x1]
      %v360 = vld [vmem:[%s352 + $0x38] sm:$0x1]
      %361 = vmatpush.msra.mxu0 %v186
      %362 = vmatpush.msra.mxu0 %v185
      %363 = vmatpush.msra.mxu0 %v184
      %364 = vmatpush.msra.mxu0 %v183
      %365 = vmatpush.msra.mxu0 %v182
      %366 = vmatpush.msra.mxu0 %v181
      %367 = vmatpush.msra.mxu0 %v180
      %368 = vmatpush.msra.mxu0 %v179
      %369 = vmatpush.msra.mxu0 %v178
      %370 = vmatpush.msra.mxu0 %v177
      %371 = vmatpush.msra.mxu0 %v176
      %372 = vmatpush.msra.mxu0 %v175
      %373 = vmatpush.msra.mxu0 %v174
      %374 = vmatpush.msra.mxu0 %v173
      %375 = vmatpush.msra.mxu0 %v172
      %376 = vmatpush.msra.mxu0 %v171
      %377 = vmatmul.f32.gmra.mxu0 %v353
      %v378 = vpop.f32.mrf.mxu0
      %v379 = vadd.f32 %v213, %v378
      %380 = vmatmul.f32.gmra.mxu0 %v355
      %v381 = vpop.f32.mrf.mxu0
      %v382 = vadd.f32 %v213, %v381
      %383 = vmatmul.f32.gmra.mxu0 %v357
      %v384 = vpop.f32.mrf.mxu0
      %v385 = vadd.f32 %v213, %v384
      %386 = vmatmul.f32.gmra.mxu0 %v359
      %v387 = vpop.f32.mrf.mxu0
      %v388 = vadd.f32 %v213, %v387
      %389 = vdwg.mxu0
      %390 = vmatpush.msra.mxu0 %v202
      %391 = vmatpush.msra.mxu0 %v201
      %392 = vmatpush.msra.mxu0 %v200
      %393 = vmatpush.msra.mxu0 %v199
      %394 = vmatpush.msra.mxu0 %v198
      %395 = vmatpush.msra.mxu0 %v197
      %396 = vmatpush.msra.mxu0 %v196
      %397 = vmatpush.msra.mxu0 %v195
      %398 = vmatpush.msra.mxu0 %v194
      %399 = vmatpush.msra.mxu0 %v193
      %400 = vmatpush.msra.mxu0 %v192
      %401 = vmatpush.msra.mxu0 %v191
      %402 = vmatpush.msra.mxu0 %v190
      %403 = vmatpush.msra.mxu0 %v189
      %404 = vmatpush.msra.mxu0 %v188
      %405 = vmatpush.msra.mxu0 %v187
      %406 = vmatmul.f32.gmra.mxu0 %v354
      %v407 = vpop.f32.mrf.mxu0
      %v408 = vadd.f32 %v379, %v407
      %409 = vmatmul.f32.gmra.mxu0 %v356
      %v410 = vpop.f32.mrf.mxu0
      %v411 = vadd.f32 %v382, %v410
      %412 = vmatmul.f32.gmra.mxu0 %v358
      %v413 = vpop.f32.mrf.mxu0
      %v414 = vadd.f32 %v385, %v413
      %415 = vmatmul.f32.gmra.mxu0 %v360
      %v416 = vpop.f32.mrf.mxu0
      %v417 = vadd.f32 %v388, %v416
      %418 = vdwg.mxu0
      %v419 = vmax.f32 %v408, 0.0
      %v420 = vmax.f32 %v411, 0.0
      %v421 = vmax.f32 %v414, 0.0
      %v422 = vmax.f32 %v417, 0.0
      %v423 = vmax.f32 %v348, %v419
      %v424 = vmax.f32 %v349, %v420
      %v425 = vmax.f32 %v350, %v421
      %v426 = vmax.f32 %v351, %v422
      %s427 = scalar_lea.vmem %s165, 192
      %v428 = vld [vmem:[%s427] sm:$0xff]
      %v429 = vld [vmem:[%s427 + $0x8] sm:$0xff]
      %v430 = vld [vmem:[%s427 + $0x10] sm:$0xff]
      %v431 = vld [vmem:[%s427 + $0x18] sm:$0xff]
      %v432 = vld [vmem:[%s427 + $0x20] sm:$0xff]
      %v433 = vld [vmem:[%s427 + $0x28] sm:$0xff]
      %v434 = vld [vmem:[%s427 + $0x30] sm:$0x1]
      %v435 = vld [vmem:[%s427 + $0x38] sm:$0x1]
      %436 = vmatpush.msra.mxu0 %v186
      %437 = vmatpush.msra.mxu0 %v185
      %438 = vmatpush.msra.mxu0 %v184
      %439 = vmatpush.msra.mxu0 %v183
      %440 = vmatpush.msra.mxu0 %v182
      %441 = vmatpush.msra.mxu0 %v181
      %442 = vmatpush.msra.mxu0 %v180
      %443 = vmatpush.msra.mxu0 %v179
      %444 = vmatpush.msra.mxu0 %v178
      %445 = vmatpush.msra.mxu0 %v177
      %446 = vmatpush.msra.mxu0 %v176
      %447 = vmatpush.msra.mxu0 %v175
      %448 = vmatpush.msra.mxu0 %v174
      %449 = vmatpush.msra.mxu0 %v173
      %450 = vmatpush.msra.mxu0 %v172
      %451 = vmatpush.msra.mxu0 %v171
      %452 = vmatmul.f32.gmra.mxu0 %v428
      %v453 = vpop.f32.mrf.mxu0
      %v454 = vadd.f32 %v213, %v453
      %455 = vmatmul.f32.gmra.mxu0 %v430
      %v456 = vpop.f32.mrf.mxu0
      %v457 = vadd.f32 %v213, %v456
      %458 = vmatmul.f32.gmra.mxu0 %v432
      %v459 = vpop.f32.mrf.mxu0
      %v460 = vadd.f32 %v213, %v459
      %461 = vmatmul.f32.gmra.mxu0 %v434
      %v462 = vpop.f32.mrf.mxu0
      %v463 = vadd.f32 %v213, %v462
      %464 = vdwg.mxu0
      %465 = vmatpush.msra.mxu0 %v202
      %466 = vmatpush.msra.mxu0 %v201
      %467 = vmatpush.msra.mxu0 %v200
      %468 = vmatpush.msra.mxu0 %v199
      %469 = vmatpush.msra.mxu0 %v198
      %470 = vmatpush.msra.mxu0 %v197
      %471 = vmatpush.msra.mxu0 %v196
      %472 = vmatpush.msra.mxu0 %v195
      %473 = vmatpush.msra.mxu0 %v194
      %474 = vmatpush.msra.mxu0 %v193
      %475 = vmatpush.msra.mxu0 %v192
      %476 = vmatpush.msra.mxu0 %v191
      %477 = vmatpush.msra.mxu0 %v190
      %478 = vmatpush.msra.mxu0 %v189
      %479 = vmatpush.msra.mxu0 %v188
      %480 = vmatpush.msra.mxu0 %v187
      %481 = vmatmul.f32.gmra.mxu0 %v429
      %v482 = vpop.f32.mrf.mxu0
      %v483 = vadd.f32 %v454, %v482
      %484 = vmatmul.f32.gmra.mxu0 %v431
      %v485 = vpop.f32.mrf.mxu0
      %v486 = vadd.f32 %v457, %v485
      %487 = vmatmul.f32.gmra.mxu0 %v433
      %v488 = vpop.f32.mrf.mxu0
      %v489 = vadd.f32 %v460, %v488
      %490 = vmatmul.f32.gmra.mxu0 %v435
      %v491 = vpop.f32.mrf.mxu0
      %v492 = vadd.f32 %v463, %v491
      %493 = vdwg.mxu0
      %v494 = vmax.f32 %v483, 0.0
      %v495 = vmax.f32 %v486, 0.0
      %v496 = vmax.f32 %v489, 0.0
      %v497 = vmax.f32 %v492, 0.0
      %v498 = vmax.f32 %v423, %v494
      %v499 = vmax.f32 %v424, %v495
      %v500 = vmax.f32 %v425, %v496
      %v501 = vmax.f32 %v426, %v497
      %502 = vst [vmem:[%s170] sm:$0xff] %v498
      %503 = vst [vmem:[%s170 + $0x8] sm:$0xff] %v499
      %504 = vst [vmem:[%s170 + $0x10] sm:$0xff] %v500
      %505 = vst [vmem:[%s170 + $0x18] sm:$0x1] %v501
      %p506 = scmp.lt.s32.totalorder %s14, 1
      %s507 = scalar_select %p506, %s14, 1
      %s508 = smul.addr %s507, 4
      %s509 = smul.addr %s508, 8
      %s510 = scalar_lea.vmem %s3, %s509
      // Predicated region
      $region33: #{net_forward.4} parent=31 // pred_check
        %p511 = pneg %p100
      $region34: #{net_forward.4} parent=31 // pred_check_branch
        %513 = sbr.rel (%p511) target = $region36
      $region35: #{net_forward.4} parent=31 // pred_region
        _
      $region36: #{net_forward.4} parent=31 // pred_fallthru
        _
    $region32: #{net_forward.4} parent=5 // pred_fallthru
      _
    %p514 = scmp.le.s32.totalorder 2, %s9
    // Predicated region
    $region37: #{net_forward.4} parent=5 // pred_check
      %p515 = pneg %p514
    $region38: #{net_forward.4} parent=5 // pred_check_branch
      %517 = sbr.rel (%p515) target = $region40
    $region39: #{net_forward.4} parent=5 // pred_region
      %s518 = ssub.s32 %s9, 2
      // Predicated region
      $region41: #{net_forward.4} parent=39 // pred_check
        %p519 = pneg %p106
      $region42: #{net_forward.4} parent=39 // pred_check_branch
        %521 = sbr.rel (%p519) target = $region44
      $region43: #{net_forward.4} parent=39 // pred_region
        %p522 = scmp.lt.s32.totalorder %s15, 1
        %s523 = scalar_select %p522, %s15, 1
        %s524 = smul.addr %s523, 4
        %s525 = smul.addr %s524, 8
        %s526 = scalar_lea.vmem %s3, %s525
      $region44: #{net_forward.4} parent=39 // pred_fallthru
        _
    $region40: #{net_forward.4} parent=5 // pred_fallthru
      _
  $region6: #{net_forward.4} parent=0 // loop_footer
    %s13 = sadd.s32 1, %s9
  $region7: #{net_forward.4} parent=0 // loop_footer_branch
    %8 = sbr.rel target = $region3
  $region8: #{net_forward.4} parent=0 // loop_exit
    _

// kernel: net_forward.5
$region0: #{net_forward.5}
  #allocation0 [shape = 'u32[]', space=smem, size = 0x4, offset = 0x4, fixed_abs, tag = 'smem constant byte address 0x4 - core index']
  #allocation1 [shape = 'u32[72,128]{1,0:T(1,128)}', space=vmem, size = 0x9000, scoped, tag = 'internal scratch']
  %s0 = inlined_call_operand.vmem [shape: f32[2,3200], index: 0, kind: input, shape index: {}]
  %s1 = inlined_call_operand.vmem [shape: f32[3200,128], index: 1, kind: input, shape index: {}]
  %s2 = inlined_call_operand.vmem [shape: f32[1,128], index: 2, kind: input, shape index: {}]
  %s3 = inlined_call_operand.vmem [shape: f32[128,128], index: 3, kind: input, shape index: {}]
  %s4 = inlined_call_operand.vmem [shape: f32[1,128], index: 4, kind: input, shape index: {}]
  %s5 = inlined_call_operand.vmem [shape: f32[128,128], index: 5, kind: input, shape index: {}]
  %s6 = inlined_call_operand.vmem [shape: f32[1,128], index: 6, kind: input, shape index: {}]
  %s7 = inlined_call_operand.hbm [shape: f32[2,128], index: 7, kind: output, shape index: {}]
  %s8 = sld [smem:[#allocation0]]
  $region38: #{net_forward.5} parent=0
    _
  %s10 = ssub.s32 1, %s8
  %s11 = scalar_select 0, %s10, %s8
  $region1: #{net_forward.5} parent=0
    #allocation2 [shape = 'u8[1024]{0}', space=vmem, size = 0x400, scoped, tag = 'output window, operand 0, single buffered']
    #allocation3 [shape = 's32[1]{0}', space=sflag, size = 0x4, scoped, tag = 'scoped memory for net_forward.5']
    %12 = vsyncpa [#allocation3], 0
    // Predicated region
    $region2: #{net_forward.5} parent=1 // pred_check
      _
    $region3: #{net_forward.5} parent=1 // pred_check_branch
      %14 = sbr.rel (0) target = $region5
    $region4: #{net_forward.5} parent=1 // pred_region
      _
    $region5: #{net_forward.5} parent=1 // pred_fallthru
      _
    // Predicated region
    $region6: #{net_forward.5} parent=1 // pred_check
      _
    $region7: #{net_forward.5} parent=1 // pred_check_branch
      %16 = sbr.rel (0) target = $region9
    $region8: #{net_forward.5} parent=1 // pred_region
      _
    $region9: #{net_forward.5} parent=1 // pred_fallthru
      _
    // Predicated region
    $region10: #{net_forward.5} parent=1 // pred_check
      _
    $region11: #{net_forward.5} parent=1 // pred_check_branch
      %18 = sbr.rel (0) target = $region13
    $region12: #{net_forward.5} parent=1 // pred_region
      _
    $region13: #{net_forward.5} parent=1 // pred_fallthru
      _
    // Predicated region
    $region14: #{net_forward.5} parent=1 // pred_check
      _
    $region15: #{net_forward.5} parent=1 // pred_check_branch
      %20 = sbr.rel (0) target = $region17
    $region16: #{net_forward.5} parent=1 // pred_region
      _
    $region17: #{net_forward.5} parent=1 // pred_fallthru
      _
    // Predicated region
    $region18: #{net_forward.5} parent=1 // pred_check
      _
    $region19: #{net_forward.5} parent=1 // pred_check_branch
      %22 = sbr.rel (0) target = $region21
    $region20: #{net_forward.5} parent=1 // pred_region
      _
    $region21: #{net_forward.5} parent=1 // pred_fallthru
      _
    // Predicated region
    $region22: #{net_forward.5} parent=1 // pred_check
      _
    $region23: #{net_forward.5} parent=1 // pred_check_branch
      %24 = sbr.rel (0) target = $region25
    $region24: #{net_forward.5} parent=1 // pred_region
      _
    $region25: #{net_forward.5} parent=1 // pred_fallthru
      _
    // Predicated region
    $region26: #{net_forward.5} parent=1 // pred_check
      _
    $region27: #{net_forward.5} parent=1 // pred_check_branch
      %26 = sbr.rel (0) target = $region29
    $region28: #{net_forward.5} parent=1 // pred_region
      _
    $region29: #{net_forward.5} parent=1 // pred_fallthru
      _
    %v27 = vld [vmem:[%s0] sm:$0xff]
    %v28 = vld [vmem:[%s0 + $0x8] sm:$0xff]
    %v29 = vld [vmem:[%s0 + $0x10] sm:$0xff]
    %v30 = vld [vmem:[%s0 + $0x18] sm:$0xff]
    %v31 = vld [vmem:[%s0 + $0x20] sm:$0xff]
    %v32 = vld [vmem:[%s0 + $0x28] sm:$0xff]
    %v33 = vld [vmem:[%s0 + $0x30] sm:$0x3]
    %v34 = vld [vmem:[%s1] sm:$0xff]
    %v35 = vld [vmem:[%s1 + $0x8] sm:$0xff]
    %v36 = vld [vmem:[%s1 + $0x10] sm:$0xff]
    %v37 = vld [vmem:[%s1 + $0x18] sm:$0xff]
    %v38 = vld [vmem:[%s1 + $0x20] sm:$0xff]
    %v39 = vld [vmem:[%s1 + $0x28] sm:$0xff]
    %v40 = vld [vmem:[%s1 + $0x30] sm:$0xff]
    %v41 = vld [vmem:[%s1 + $0x38] sm:$0xff]
    %v42 = vld [vmem:[%s1 + $0x40] sm:$0xff]
    %v43 = vld [vmem:[%s1 + $0x48] sm:$0xff]
    %v44 = vld [vmem:[%s1 + $0x50] sm:$0xff]
    %v45 = vld [vmem:[%s1 + $0x58] sm:$0xff]
    %v46 = vld [vmem:[%s1 + $0x60] sm:$0xff]
    %v47 = vld [vmem:[%s1 + $0x68] sm:$0xff]
    %v48 = vld [vmem:[%s1 + $0x70] sm:$0xff]
    %v49 = vld [vmem:[%s1 + $0x78] sm:$0xff]
    %v50 = vld [vmem:[%s1 + $0x80] sm:$0xff]
    %v51 = vld [vmem:[%s1 + $0x88] sm:$0xff]
    %v52 = vld [vmem:[%s1 + $0x90] sm:$0xff]
    %v53 = vld [vmem:[%s1 + $0x98] sm:$0xff]
    %v54 = vld [vmem:[%s1 + $0xa0] sm:$0xff]
    %v55 = vld [vmem:[%s1 + $0xa8] sm:$0xff]
    %v56 = vld [vmem:[%s1 + $0xb0] sm:$0xff]
    %v57 = vld [vmem:[%s1 + $0xb8] sm:$0xff]
    %v58 = vld [vmem:[%s1 + $0xc0] sm:$0xff]
    %v59 = vld [vmem:[%s1 + $0xc8] sm:$0xff]
    %v60 = vld [vmem:[%s1 + $0xd0] sm:$0xff]
    %v61 = vld [vmem:[%s1 + $0xd8] sm:$0xff]
    %v62 = vld [vmem:[%s1 + $0xe0] sm:$0xff]
    %v63 = vld [vmem:[%s1 + $0xe8] sm:$0xff]
    %v64 = vld [vmem:[%s1 + $0xf0] sm:$0xff]
    %v65 = vld [vmem:[%s1 + $0xf8] sm:$0xff]
    %v66 = vld [vmem:[%s1 + $0x100] sm:$0xff]
    %v67 = vld [vmem:[%s1 + $0x108] sm:$0xff]
    %v68 = vld [vmem:[%s1 + $0x110] sm:$0xff]
    %v69 = vld [vmem:[%s1 + $0x118] sm:$0xff]
    %v70 = vld [vmem:[%s1 + $0x120] sm:$0xff]
    %v71 = vld [vmem:[%s1 + $0x128] sm:$0xff]
    %v72 = vld [vmem:[%s1 + $0x130] sm:$0xff]
    %v73 = vld [vmem:[%s1 + $0x138] sm:$0xff]
    %v74 = vld [vmem:[%s1 + $0x140] sm:$0xff]
    %v75 = vld [vmem:[%s1 + $0x148] sm:$0xff]
    %v76 = vld [vmem:[%s1 + $0x150] sm:$0xff]
    %v77 = vld [vmem:[%s1 + $0x158] sm:$0xff]
    %v78 = vld [vmem:[%s1 + $0x160] sm:$0xff]
    %v79 = vld [vmem:[%s1 + $0x168] sm:$0xff]
    %v80 = vld [vmem:[%s1 + $0x170] sm:$0xff]
    %v81 = vld [vmem:[%s1 + $0x178] sm:$0xff]
    %v82 = vld [vmem:[%s1 + $0x180] sm:$0xff]
    %v83 = vld [vmem:[%s1 + $0x188] sm:$0xff]
    %v84 = vld [vmem:[%s1 + $0x190] sm:$0xff]
    %v85 = vld [vmem:[%s1 + $0x198] sm:$0xff]
    %v86 = vld [vmem:[%s1 + $0x1a0] sm:$0xff]
    %v87 = vld [vmem:[%s1 + $0x1a8] sm:$0xff]
    %v88 = vld [vmem:[%s1 + $0x1b0] sm:$0xff]
    %v89 = vld [vmem:[%s1 + $0x1b8] sm:$0xff]
    %v90 = vld [vmem:[%s1 + $0x1c0] sm:$0xff]
    %v91 = vld [vmem:[%s1 + $0x1c8] sm:$0xff]
    %v92 = vld [vmem:[%s1 + $0x1d0] sm:$0xff]
    %v93 = vld [vmem:[%s1 + $0x1d8] sm:$0xff]
    %v94 = vld [vmem:[%s1 + $0x1e0] sm:$0xff]
    %v95 = vld [vmem:[%s1 + $0x1e8] sm:$0xff]
    %v96 = vld [vmem:[%s1 + $0x1f0] sm:$0xff]
    %v97 = vld [vmem:[%s1 + $0x1f8] sm:$0xff]
    %v98 = vld [vmem:[%s1 + $0x200] sm:$0xff]
    %v99 = vld [vmem:[%s1 + $0x208] sm:$0xff]
    %v100 = vld [vmem:[%s1 + $0x210] sm:$0xff]
    %v101 = vld [vmem:[%s1 + $0x218] sm:$0xff]
    %v102 = vld [vmem:[%s1 + $0x220] sm:$0xff]
    %v103 = vld [vmem:[%s1 + $0x228] sm:$0xff]
    %v104 = vld [vmem:[%s1 + $0x230] sm:$0xff]
    %v105 = vld [vmem:[%s1 + $0x238] sm:$0xff]
    %v106 = vld [vmem:[%s1 + $0x240] sm:$0xff]
    %v107 = vld [vmem:[%s1 + $0x248] sm:$0xff]
    %v108 = vld [vmem:[%s1 + $0x250] sm:$0xff]
    %v109 = vld [vmem:[%s1 + $0x258] sm:$0xff]
    %v110 = vld [vmem:[%s1 + $0x260] sm:$0xff]
    %v111 = vld [vmem:[%s1 + $0x268] sm:$0xff]
    %v112 = vld [vmem:[%s1 + $0x270] sm:$0xff]
    %v113 = vld [vmem:[%s1 + $0x278] sm:$0xff]
    %v114 = vld [vmem:[%s1 + $0x280] sm:$0xff]
    %v115 = vld [vmem:[%s1 + $0x288] sm:$0xff]
    %v116 = vld [vmem:[%s1 + $0x290] sm:$0xff]
    %v117 = vld [vmem:[%s1 + $0x298] sm:$0xff]
    %v118 = vld [vmem:[%s1 + $0x2a0] sm:$0xff]
    %v119 = vld [vmem:[%s1 + $0x2a8] sm:$0xff]
    %v120 = vld [vmem:[%s1 + $0x2b0] sm:$0xff]
    %v121 = vld [vmem:[%s1 + $0x2b8] sm:$0xff]
    %v122 = vld [vmem:[%s1 + $0x2c0] sm:$0xff]
    %v123 = vld [vmem:[%s1 + $0x2c8] sm:$0xff]
    %v124 = vld [vmem:[%s1 + $0x2d0] sm:$0xff]
    %v125 = vld [vmem:[%s1 + $0x2d8] sm:$0xff]
    %v126 = vld [vmem:[%s1 + $0x2e0] sm:$0xff]
    %v127 = vld [vmem:[%s1 + $0x2e8] sm:$0xff]
    %v128 = vld [vmem:[%s1 + $0x2f0] sm:$0xff]
    %v129 = vld [vmem:[%s1 + $0x2f8] sm:$0xff]
    %v130 = vld [vmem:[%s1 + $0x300] sm:$0xff]
    %v131 = vld [vmem:[%s1 + $0x308] sm:$0xff]
    %v132 = vld [vmem:[%s1 + $0x310] sm:$0xff]
    %v133 = vld [vmem:[%s1 + $0x318] sm:$0xff]
    %v134 = vld [vmem:[%s1 + $0x320] sm:$0xff]
    %v135 = vld [vmem:[%s1 + $0x328] sm:$0xff]
    %v136 = vld [vmem:[%s1 + $0x330] sm:$0xff]
    %v137 = vld [vmem:[%s1 + $0x338] sm:$0xff]
    %v138 = vld [vmem:[%s1 + $0x340] sm:$0xff]
    %v139 = vld [vmem:[%s1 + $0x348] sm:$0xff]
    %v140 = vld [vmem:[%s1 + $0x350] sm:$0xff]
    %v141 = vld [vmem:[%s1 + $0x358] sm:$0xff]
    %v142 = vld [vmem:[%s1 + $0x360] sm:$0xff]
    %v143 = vld [vmem:[%s1 + $0x368] sm:$0xff]
    %v144 = vld [vmem:[%s1 + $0x370] sm:$0xff]
    %v145 = vld [vmem:[%s1 + $0x378] sm:$0xff]
    %v146 = vld [vmem:[%s1 + $0x380] sm:$0xff]
    %v147 = vld [vmem:[%s1 + $0x388] sm:$0xff]
    %v148 = vld [vmem:[%s1 + $0x390] sm:$0xff]
    %v149 = vld [vmem:[%s1 + $0x398] sm:$0xff]
    %v150 = vld [vmem:[%s1 + $0x3a0] sm:$0xff]
    %v151 = vld [vmem:[%s1 + $0x3a8] sm:$0xff]
    %v152 = vld [vmem:[%s1 + $0x3b0] sm:$0xff]
    %v153 = vld [vmem:[%s1 + $0x3b8] sm:$0xff]
    %v154 = vld [vmem:[%s1 + $0x3c0] sm:$0xff]
    %v155 = vld [vmem:[%s1 + $0x3c8] sm:$0xff]
    %v156 = vld [vmem:[%s1 + $0x3d0] sm:$0xff]
    %v157 = vld [vmem:[%s1 + $0x3d8] sm:$0xff]
    %v158 = vld [vmem:[%s1 + $0x3e0] sm:$0xff]
    %v159 = vld [vmem:[%s1 + $0x3e8] sm:$0xff]
    %v160 = vld [vmem:[%s1 + $0x3f0] sm:$0xff]
    %v161 = vld [vmem:[%s1 + $0x3f8] sm:$0xff]
    %v162 = vld [vmem:[%s1 + $0x400] sm:$0xff]
    %v163 = vld [vmem:[%s1 + $0x408] sm:$0xff]
    %v164 = vld [vmem:[%s1 + $0x410] sm:$0xff]
    %v165 = vld [vmem:[%s1 + $0x418] sm:$0xff]
    %v166 = vld [vmem:[%s1 + $0x420] sm:$0xff]
    %v167 = vld [vmem:[%s1 + $0x428] sm:$0xff]
    %v168 = vld [vmem:[%s1 + $0x430] sm:$0xff]
    %v169 = vld [vmem:[%s1 + $0x438] sm:$0xff]
    %v170 = vld [vmem:[%s1 + $0x440] sm:$0xff]
    %v171 = vld [vmem:[%s1 + $0x448] sm:$0xff]
    %v172 = vld [vmem:[%s1 + $0x450] sm:$0xff]
    %v173 = vld [vmem:[%s1 + $0x458] sm:$0xff]
    %v174 = vld [vmem:[%s1 + $0x460] sm:$0xff]
    %v175 = vld [vmem:[%s1 + $0x468] sm:$0xff]
    %v176 = vld [vmem:[%s1 + $0x470] sm:$0xff]
    %v177 = vld [vmem:[%s1 + $0x478] sm:$0xff]
    %v178 = vld [vmem:[%s1 + $0x480] sm:$0xff]
    %v179 = vld [vmem:[%s1 + $0x488] sm:$0xff]
    %v180 = vld [vmem:[%s1 + $0x490] sm:$0xff]
    %v181 = vld [vmem:[%s1 + $0x498] sm:$0xff]
    %v182 = vld [vmem:[%s1 + $0x4a0] sm:$0xff]
    %v183 = vld [vmem:[%s1 + $0x4a8] sm:$0xff]
    %v184 = vld [vmem:[%s1 + $0x4b0] sm:$0xff]
    %v185 = vld [vmem:[%s1 + $0x4b8] sm:$0xff]
    %v186 = vld [vmem:[%s1 + $0x4c0] sm:$0xff]
    %v187 = vld [vmem:[%s1 + $0x4c8] sm:$0xff]
    %v188 = vld [vmem:[%s1 + $0x4d0] sm:$0xff]
    %v189 = vld [vmem:[%s1 + $0x4d8] sm:$0xff]
    %v190 = vld [vmem:[%s1 + $0x4e0] sm:$0xff]
    %v191 = vld [vmem:[%s1 + $0x4e8] sm:$0xff]
    %v192 = vld [vmem:[%s1 + $0x4f0] sm:$0xff]
    %v193 = vld [vmem:[%s1 + $0x4f8] sm:$0xff]
    %v194 = vld [vmem:[%s1 + $0x500] sm:$0xff]
    %v195 = vld [vmem:[%s1 + $0x508] sm:$0xff]
    %v196 = vld [vmem:[%s1 + $0x510] sm:$0xff]
    %v197 = vld [vmem:[%s1 + $0x518] sm:$0xff]
    %v198 = vld [vmem:[%s1 + $0x520] sm:$0xff]
    %v199 = vld [vmem:[%s1 + $0x528] sm:$0xff]
    %v200 = vld [vmem:[%s1 + $0x530] sm:$0xff]
    %v201 = vld [vmem:[%s1 + $0x538] sm:$0xff]
    %v202 = vld [vmem:[%s1 + $0x540] sm:$0xff]
    %v203 = vld [vmem:[%s1 + $0x548] sm:$0xff]
    %v204 = vld [vmem:[%s1 + $0x550] sm:$0xff]
    %v205 = vld [vmem:[%s1 + $0x558] sm:$0xff]
    %v206 = vld [vmem:[%s1 + $0x560] sm:$0xff]
    %v207 = vld [vmem:[%s1 + $0x568] sm:$0xff]
    %v208 = vld [vmem:[%s1 + $0x570] sm:$0xff]
    %v209 = vld [vmem:[%s1 + $0x578] sm:$0xff]
    %v210 = vld [vmem:[%s1 + $0x580] sm:$0xff]
    %v211 = vld [vmem:[%s1 + $0x588] sm:$0xff]
    %v212 = vld [vmem:[%s1 + $0x590] sm:$0xff]
    %v213 = vld [vmem:[%s1 + $0x598] sm:$0xff]
    %v214 = vld [vmem:[%s1 + $0x5a0] sm:$0xff]
    %v215 = vld [vmem:[%s1 + $0x5a8] sm:$0xff]
    %v216 = vld [vmem:[%s1 + $0x5b0] sm:$0xff]
    %v217 = vld [vmem:[%s1 + $0x5b8] sm:$0xff]
    %v218 = vld [vmem:[%s1 + $0x5c0] sm:$0xff]
    %v219 = vld [vmem:[%s1 + $0x5c8] sm:$0xff]
    %v220 = vld [vmem:[%s1 + $0x5d0] sm:$0xff]
    %v221 = vld [vmem:[%s1 + $0x5d8] sm:$0xff]
    %v222 = vld [vmem:[%s1 + $0x5e0] sm:$0xff]
    %v223 = vld [vmem:[%s1 + $0x5e8] sm:$0xff]
    %v224 = vld [vmem:[%s1 + $0x5f0] sm:$0xff]
    %v225 = vld [vmem:[%s1 + $0x5f8] sm:$0xff]
    %v226 = vld [vmem:[%s1 + $0x600] sm:$0xff]
    %v227 = vld [vmem:[%s1 + $0x608] sm:$0xff]
    %v228 = vld [vmem:[%s1 + $0x610] sm:$0xff]
    %v229 = vld [vmem:[%s1 + $0x618] sm:$0xff]
    %v230 = vld [vmem:[%s1 + $0x620] sm:$0xff]
    %v231 = vld [vmem:[%s1 + $0x628] sm:$0xff]
    %v232 = vld [vmem:[%s1 + $0x630] sm:$0xff]
    %v233 = vld [vmem:[%s1 + $0x638] sm:$0xff]
    %v234 = vld [vmem:[%s1 + $0x640] sm:$0xff]
    %v235 = vld [vmem:[%s1 + $0x648] sm:$0xff]
    %v236 = vld [vmem:[%s1 + $0x650] sm:$0xff]
    %v237 = vld [vmem:[%s1 + $0x658] sm:$0xff]
    %v238 = vld [vmem:[%s1 + $0x660] sm:$0xff]
    %v239 = vld [vmem:[%s1 + $0x668] sm:$0xff]
    %v240 = vld [vmem:[%s1 + $0x670] sm:$0xff]
    %v241 = vld [vmem:[%s1 + $0x678] sm:$0xff]
    %v242 = vld [vmem:[%s1 + $0x680] sm:$0xff]
    %v243 = vld [vmem:[%s1 + $0x688] sm:$0xff]
    %v244 = vld [vmem:[%s1 + $0x690] sm:$0xff]
    %v245 = vld [vmem:[%s1 + $0x698] sm:$0xff]
    %v246 = vld [vmem:[%s1 + $0x6a0] sm:$0xff]
    %v247 = vld [vmem:[%s1 + $0x6a8] sm:$0xff]
    %v248 = vld [vmem:[%s1 + $0x6b0] sm:$0xff]
    %v249 = vld [vmem:[%s1 + $0x6b8] sm:$0xff]
    %v250 = vld [vmem:[%s1 + $0x6c0] sm:$0xff]
    %v251 = vld [vmem:[%s1 + $0x6c8] sm:$0xff]
    %v252 = vld [vmem:[%s1 + $0x6d0] sm:$0xff]
    %v253 = vld [vmem:[%s1 + $0x6d8] sm:$0xff]
    %v254 = vld [vmem:[%s1 + $0x6e0] sm:$0xff]
    %v255 = vld [vmem:[%s1 + $0x6e8] sm:$0xff]
    %v256 = vld [vmem:[%s1 + $0x6f0] sm:$0xff]
    %v257 = vld [vmem:[%s1 + $0x6f8] sm:$0xff]
    %v258 = vld [vmem:[%s1 + $0x700] sm:$0xff]
    %v259 = vld [vmem:[%s1 + $0x708] sm:$0xff]
    %v260 = vld [vmem:[%s1 + $0x710] sm:$0xff]
    %v261 = vld [vmem:[%s1 + $0x718] sm:$0xff]
    %v262 = vld [vmem:[%s1 + $0x720] sm:$0xff]
    %v263 = vld [vmem:[%s1 + $0x728] sm:$0xff]
    %v264 = vld [vmem:[%s1 + $0x730] sm:$0xff]
    %v265 = vld [vmem:[%s1 + $0x738] sm:$0xff]
    %v266 = vld [vmem:[%s1 + $0x740] sm:$0xff]
    %v267 = vld [vmem:[%s1 + $0x748] sm:$0xff]
    %v268 = vld [vmem:[%s1 + $0x750] sm:$0xff]
    %v269 = vld [vmem:[%s1 + $0x758] sm:$0xff]
    %v270 = vld [vmem:[%s1 + $0x760] sm:$0xff]
    %v271 = vld [vmem:[%s1 + $0x768] sm:$0xff]
    %v272 = vld [vmem:[%s1 + $0x770] sm:$0xff]
    %v273 = vld [vmem:[%s1 + $0x778] sm:$0xff]
    %v274 = vld [vmem:[%s1 + $0x780] sm:$0xff]
    %v275 = vld [vmem:[%s1 + $0x788] sm:$0xff]
    %v276 = vld [vmem:[%s1 + $0x790] sm:$0xff]
    %v277 = vld [vmem:[%s1 + $0x798] sm:$0xff]
    %v278 = vld [vmem:[%s1 + $0x7a0] sm:$0xff]
    %v279 = vld [vmem:[%s1 + $0x7a8] sm:$0xff]
    %v280 = vld [vmem:[%s1 + $0x7b0] sm:$0xff]
    %v281 = vld [vmem:[%s1 + $0x7b8] sm:$0xff]
    %v282 = vld [vmem:[%s1 + $0x7c0] sm:$0xff]
    %v283 = vld [vmem:[%s1 + $0x7c8] sm:$0xff]
    %v284 = vld [vmem:[%s1 + $0x7d0] sm:$0xff]
    %v285 = vld [vmem:[%s1 + $0x7d8] sm:$0xff]
    %v286 = vld [vmem:[%s1 + $0x7e0] sm:$0xff]
    %v287 = vld [vmem:[%s1 + $0x7e8] sm:$0xff]
    %v288 = vld [vmem:[%s1 + $0x7f0] sm:$0xff]
    %v289 = vld [vmem:[%s1 + $0x7f8] sm:$0xff]
    %v290 = vld [vmem:[%s1 + $0x800] sm:$0xff]
    %v291 = vld [vmem:[%s1 + $0x808] sm:$0xff]
    %v292 = vld [vmem:[%s1 + $0x810] sm:$0xff]
    %v293 = vld [vmem:[%s1 + $0x818] sm:$0xff]
    %v294 = vld [vmem:[%s1 + $0x820] sm:$0xff]
    %v295 = vld [vmem:[%s1 + $0x828] sm:$0xff]
    %v296 = vld [vmem:[%s1 + $0x830] sm:$0xff]
    %v297 = vld [vmem:[%s1 + $0x838] sm:$0xff]
    %v298 = vld [vmem:[%s1 + $0x840] sm:$0xff]
    %v299 = vld [vmem:[%s1 + $0x848] sm:$0xff]
    %v300 = vld [vmem:[%s1 + $0x850] sm:$0xff]
    %v301 = vld [vmem:[%s1 + $0x858] sm:$0xff]
    %v302 = vld [vmem:[%s1 + $0x860] sm:$0xff]
    %v303 = vld [vmem:[%s1 + $0x868] sm:$0xff]
    %v304 = vld [vmem:[%s1 + $0x870] sm:$0xff]
    %v305 = vld [vmem:[%s1 + $0x878] sm:$0xff]
    %v306 = vld [vmem:[%s1 + $0x880] sm:$0xff]
    %v307 = vld [vmem:[%s1 + $0x888] sm:$0xff]
    %v308 = vld [vmem:[%s1 + $0x890] sm:$0xff]
    %v309 = vld [vmem:[%s1 + $0x898] sm:$0xff]
    %v310 = vld [vmem:[%s1 + $0x8a0] sm:$0xff]
    %v311 = vld [vmem:[%s1 + $0x8a8] sm:$0xff]
    %v312 = vld [vmem:[%s1 + $0x8b0] sm:$0xff]
    %v313 = vld [vmem:[%s1 + $0x8b8] sm:$0xff]
    %v314 = vld [vmem:[%s1 + $0x8c0] sm:$0xff]
    %v315 = vld [vmem:[%s1 + $0x8c8] sm:$0xff]
    %v316 = vld [vmem:[%s1 + $0x8d0] sm:$0xff]
    %v317 = vld [vmem:[%s1 + $0x8d8] sm:$0xff]
    %v318 = vld [vmem:[%s1 + $0x8e0] sm:$0xff]
    %v319 = vld [vmem:[%s1 + $0x8e8] sm:$0xff]
    %v320 = vld [vmem:[%s1 + $0x8f0] sm:$0xff]
    %v321 = vld [vmem:[%s1 + $0x8f8] sm:$0xff]
    %v322 = vld [vmem:[%s1 + $0x900] sm:$0xff]
    %v323 = vld [vmem:[%s1 + $0x908] sm:$0xff]
    %v324 = vld [vmem:[%s1 + $0x910] sm:$0xff]
    %v325 = vld [vmem:[%s1 + $0x918] sm:$0xff]
    %v326 = vld [vmem:[%s1 + $0x920] sm:$0xff]
    %v327 = vld [vmem:[%s1 + $0x928] sm:$0xff]
    %v328 = vld [vmem:[%s1 + $0x930] sm:$0xff]
    %v329 = vld [vmem:[%s1 + $0x938] sm:$0xff]
    %v330 = vld [vmem:[%s1 + $0x940] sm:$0xff]
    %v331 = vld [vmem:[%s1 + $0x948] sm:$0xff]
    %v332 = vld [vmem:[%s1 + $0x950] sm:$0xff]
    %v333 = vld [vmem:[%s1 + $0x958] sm:$0xff]
    %v334 = vld [vmem:[%s1 + $0x960] sm:$0xff]
    %v335 = vld [vmem:[%s1 + $0x968] sm:$0xff]
    %v336 = vld [vmem:[%s1 + $0x970] sm:$0xff]
    %v337 = vld [vmem:[%s1 + $0x978] sm:$0xff]
    %v338 = vld [vmem:[%s1 + $0x980] sm:$0xff]
    %v339 = vld [vmem:[%s1 + $0x988] sm:$0xff]
    %v340 = vld [vmem:[%s1 + $0x990] sm:$0xff]
    %v341 = vld [vmem:[%s1 + $0x998] sm:$0xff]
    %v342 = vld [vmem:[%s1 + $0x9a0] sm:$0xff]
    %v343 = vld [vmem:[%s1 + $0x9a8] sm:$0xff]
    %v344 = vld [vmem:[%s1 + $0x9b0] sm:$0xff]
    %v345 = vld [vmem:[%s1 + $0x9b8] sm:$0xff]
    %v346 = vld [vmem:[%s1 + $0x9c0] sm:$0xff]
    %v347 = vld [vmem:[%s1 + $0x9c8] sm:$0xff]
    %v348 = vld [vmem:[%s1 + $0x9d0] sm:$0xff]
    %v349 = vld [vmem:[%s1 + $0x9d8] sm:$0xff]
    %v350 = vld [vmem:[%s1 + $0x9e0] sm:$0xff]
    %v351 = vld [vmem:[%s1 + $0x9e8] sm:$0xff]
    %v352 = vld [vmem:[%s1 + $0x9f0] sm:$0xff]
    %v353 = vld [vmem:[%s1 + $0x9f8] sm:$0xff]
    %v354 = vld [vmem:[%s1 + $0xa00] sm:$0xff]
    %v355 = vld [vmem:[%s1 + $0xa08] sm:$0xff]
    %v356 = vld [vmem:[%s1 + $0xa10] sm:$0xff]
    %v357 = vld [vmem:[%s1 + $0xa18] sm:$0xff]
    %v358 = vld [vmem:[%s1 + $0xa20] sm:$0xff]
    %v359 = vld [vmem:[%s1 + $0xa28] sm:$0xff]
    %v360 = vld [vmem:[%s1 + $0xa30] sm:$0xff]
    %v361 = vld [vmem:[%s1 + $0xa38] sm:$0xff]
    %v362 = vld [vmem:[%s1 + $0xa40] sm:$0xff]
    %v363 = vld [vmem:[%s1 + $0xa48] sm:$0xff]
    %v364 = vld [vmem:[%s1 + $0xa50] sm:$0xff]
    %v365 = vld [vmem:[%s1 + $0xa58] sm:$0xff]
    %v366 = vld [vmem:[%s1 + $0xa60] sm:$0xff]
    %v367 = vld [vmem:[%s1 + $0xa68] sm:$0xff]
    %v368 = vld [vmem:[%s1 + $0xa70] sm:$0xff]
    %v369 = vld [vmem:[%s1 + $0xa78] sm:$0xff]
    %v370 = vld [vmem:[%s1 + $0xa80] sm:$0xff]
    %v371 = vld [vmem:[%s1 + $0xa88] sm:$0xff]
    %v372 = vld [vmem:[%s1 + $0xa90] sm:$0xff]
    %v373 = vld [vmem:[%s1 + $0xa98] sm:$0xff]
    %v374 = vld [vmem:[%s1 + $0xaa0] sm:$0xff]
    %v375 = vld [vmem:[%s1 + $0xaa8] sm:$0xff]
    %v376 = vld [vmem:[%s1 + $0xab0] sm:$0xff]
    %v377 = vld [vmem:[%s1 + $0xab8] sm:$0xff]
    %v378 = vld [vmem:[%s1 + $0xac0] sm:$0xff]
    %v379 = vld [vmem:[%s1 + $0xac8] sm:$0xff]
    %v380 = vld [vmem:[%s1 + $0xad0] sm:$0xff]
    %v381 = vld [vmem:[%s1 + $0xad8] sm:$0xff]
    %v382 = vld [vmem:[%s1 + $0xae0] sm:$0xff]
    %v383 = vld [vmem:[%s1 + $0xae8] sm:$0xff]
    %v384 = vld [vmem:[%s1 + $0xaf0] sm:$0xff]
    %v385 = vld [vmem:[%s1 + $0xaf8] sm:$0xff]
    %v386 = vld [vmem:[%s1 + $0xb00] sm:$0xff]
    %v387 = vld [vmem:[%s1 + $0xb08] sm:$0xff]
    %v388 = vld [vmem:[%s1 + $0xb10] sm:$0xff]
    %v389 = vld [vmem:[%s1 + $0xb18] sm:$0xff]
    %v390 = vld [vmem:[%s1 + $0xb20] sm:$0xff]
    %v391 = vld [vmem:[%s1 + $0xb28] sm:$0xff]
    %v392 = vld [vmem:[%s1 + $0xb30] sm:$0xff]
    %v393 = vld [vmem:[%s1 + $0xb38] sm:$0xff]
    %v394 = vld [vmem:[%s1 + $0xb40] sm:$0xff]
    %v395 = vld [vmem:[%s1 + $0xb48] sm:$0xff]
    %v396 = vld [vmem:[%s1 + $0xb50] sm:$0xff]
    %v397 = vld [vmem:[%s1 + $0xb58] sm:$0xff]
    %v398 = vld [vmem:[%s1 + $0xb60] sm:$0xff]
    %v399 = vld [vmem:[%s1 + $0xb68] sm:$0xff]
    %v400 = vld [vmem:[%s1 + $0xb70] sm:$0xff]
    %v401 = vld [vmem:[%s1 + $0xb78] sm:$0xff]
    %v402 = vld [vmem:[%s1 + $0xb80] sm:$0xff]
    %v403 = vld [vmem:[%s1 + $0xb88] sm:$0xff]
    %v404 = vld [vmem:[%s1 + $0xb90] sm:$0xff]
    %v405 = vld [vmem:[%s1 + $0xb98] sm:$0xff]
    %v406 = vld [vmem:[%s1 + $0xba0] sm:$0xff]
    %v407 = vld [vmem:[%s1 + $0xba8] sm:$0xff]
    %v408 = vld [vmem:[%s1 + $0xbb0] sm:$0xff]
    %v409 = vld [vmem:[%s1 + $0xbb8] sm:$0xff]
    %v410 = vld [vmem:[%s1 + $0xbc0] sm:$0xff]
    %v411 = vld [vmem:[%s1 + $0xbc8] sm:$0xff]
    %v412 = vld [vmem:[%s1 + $0xbd0] sm:$0xff]
    %v413 = vld [vmem:[%s1 + $0xbd8] sm:$0xff]
    %v414 = vld [vmem:[%s1 + $0xbe0] sm:$0xff]
    %v415 = vld [vmem:[%s1 + $0xbe8] sm:$0xff]
    %v416 = vld [vmem:[%s1 + $0xbf0] sm:$0xff]
    %v417 = vld [vmem:[%s1 + $0xbf8] sm:$0xff]
    %v418 = vld [vmem:[%s1 + $0xc00] sm:$0xff]
    %v419 = vld [vmem:[%s1 + $0xc08] sm:$0xff]
    %v420 = vld [vmem:[%s1 + $0xc10] sm:$0xff]
    %v421 = vld [vmem:[%s1 + $0xc18] sm:$0xff]
    %v422 = vld [vmem:[%s1 + $0xc20] sm:$0xff]
    %v423 = vld [vmem:[%s1 + $0xc28] sm:$0xff]
    %v424 = vld [vmem:[%s1 + $0xc30] sm:$0xff]
    %v425 = vld [vmem:[%s1 + $0xc38] sm:$0xff]
    %v426 = vld [vmem:[%s1 + $0xc40] sm:$0xff]
    %v427 = vld [vmem:[%s1 + $0xc48] sm:$0xff]
    %v428 = vld [vmem:[%s1 + $0xc50] sm:$0xff]
    %v429 = vld [vmem:[%s1 + $0xc58] sm:$0xff]
    %v430 = vld [vmem:[%s1 + $0xc60] sm:$0xff]
    %v431 = vld [vmem:[%s1 + $0xc68] sm:$0xff]
    %v432 = vld [vmem:[%s1 + $0xc70] sm:$0xff]
    %v433 = vld [vmem:[%s1 + $0xc78] sm:$0xff]
    %v434 = vld [vmem:[%s2] sm:$0x1]
    %v436 = vperm.slane %v434, 0
    %445 = vst [vmem:[#allocation1] ss:$4 sm:$0xff] %v27
    %s446 = scalar_lea.vmem [#allocation1], 32
    %447 = vst [vmem:[%s446] ss:$4 sm:$0xff] %v28
    %v448 = vld.sshfl [vmem:[#allocation1] sm:$0xff pattern:$0x73625140]
    %v449 = vld.sshfl [vmem:[#allocation1 + $0x8] sm:$0xff pattern:$0x73625140]
    %v450 = vld.sshfl [vmem:[#allocation1 + $0x10] sm:$0xff pattern:$0x73625140]
    %v451 = vld.sshfl [vmem:[#allocation1 + $0x18] sm:$0xff pattern:$0x73625140]
    %v452 = vld.sshfl [vmem:[#allocation1 + $0x20] sm:$0xff pattern:$0x73625140]
    %v453 = vld.sshfl [vmem:[#allocation1 + $0x28] sm:$0xff pattern:$0x73625140]
    %v454 = vld.sshfl [vmem:[#allocation1 + $0x30] sm:$0xff pattern:$0x73625140]
    %v455 = vld.sshfl [vmem:[#allocation1 + $0x38] sm:$0xff pattern:$0x73625140]
    %456 = vst [vmem:[#allocation1] ss:$4 sm:$0xff] %v29
    %457 = vst [vmem:[%s446] ss:$4 sm:$0xff] %v30
    %v458 = vld.sshfl [vmem:[#allocation1] sm:$0xff pattern:$0x73625140]
    %v459 = vld.sshfl [vmem:[#allocation1 + $0x8] sm:$0xff pattern:$0x73625140]
    %v460 = vld.sshfl [vmem:[#allocation1 + $0x10] sm:$0xff pattern:$0x73625140]
    %v461 = vld.sshfl [vmem:[#allocation1 + $0x18] sm:$0xff pattern:$0x73625140]
    %v462 = vld.sshfl [vmem:[#allocation1 + $0x20] sm:$0xff pattern:$0x73625140]
    %v463 = vld.sshfl [vmem:[#allocation1 + $0x28] sm:$0xff pattern:$0x73625140]
    %v464 = vld.sshfl [vmem:[#allocation1 + $0x30] sm:$0xff pattern:$0x73625140]
    %v465 = vld.sshfl [vmem:[#allocation1 + $0x38] sm:$0xff pattern:$0x73625140]
    %466 = vst [vmem:[#allocation1] ss:$4 sm:$0xff] %v31
    %467 = vst [vmem:[%s446] ss:$4 sm:$0xff] %v32
    %v468 = vld.sshfl [vmem:[#allocation1] sm:$0xff pattern:$0x73625140]
    %v469 = vld.sshfl [vmem:[#allocation1 + $0x8] sm:$0xff pattern:$0x73625140]
    %v470 = vld.sshfl [vmem:[#allocation1 + $0x10] sm:$0xff pattern:$0x73625140]
    %v471 = vld.sshfl [vmem:[#allocation1 + $0x18] sm:$0xff pattern:$0x73625140]
    %v472 = vld.sshfl [vmem:[#allocation1 + $0x20] sm:$0xff pattern:$0x73625140]
    %v473 = vld.sshfl [vmem:[#allocation1 + $0x28] sm:$0xff pattern:$0x73625140]
    %v474 = vld.sshfl [vmem:[#allocation1 + $0x30] sm:$0xff pattern:$0x73625140]
    %v475 = vld.sshfl [vmem:[#allocation1 + $0x38] sm:$0xff pattern:$0x73625140]
    %476 = vst [vmem:[#allocation1] ss:$4 sm:$0xff] %v33
    %v477 = vld.sshfl [vmem:[#allocation1] sm:$0xff pattern:$0x73625140]
    %503 = vmatpush.msra.mxu0 %v49
    %504 = vmatpush.msra.mxu0 %v48
    %505 = vmatpush.msra.mxu0 %v47
    %506 = vmatpush.msra.mxu0 %v46
    %507 = vmatpush.msra.mxu0 %v45
    %508 = vmatpush.msra.mxu0 %v44
    %509 = vmatpush.msra.mxu0 %v43
    %510 = vmatpush.msra.mxu0 %v42
    %511 = vmatpush.msra.mxu0 %v41
    %512 = vmatpush.msra.mxu0 %v40
    %513 = vmatpush.msra.mxu0 %v39
    %514 = vmatpush.msra.mxu0 %v38
    %515 = vmatpush.msra.mxu0 %v37
    %516 = vmatpush.msra.mxu0 %v36
    %517 = vmatpush.msra.mxu0 %v35
    %518 = vmatpush.msra.mxu0 %v34
    %519 = vmatmul.f32.gmra.mxu0 %v448
    %v520 = vpop.f32.mrf.mxu0
    %v521 = vadd.f32 %v436, %v520
    %522 = vdwg.mxu0
    %523 = vmatpush.msra.mxu0 %v65
    %524 = vmatpush.msra.mxu0 %v64
    %525 = vmatpush.msra.mxu0 %v63
    %526 = vmatpush.msra.mxu0 %v62
    %527 = vmatpush.msra.mxu0 %v61
    %528 = vmatpush.msra.mxu0 %v60
    %529 = vmatpush.msra.mxu0 %v59
    %530 = vmatpush.msra.mxu0 %v58
    %531 = vmatpush.msra.mxu0 %v57
    %532 = vmatpush.msra.mxu0 %v56
    %533 = vmatpush.msra.mxu0 %v55
    %534 = vmatpush.msra.mxu0 %v54
    %535 = vmatpush.msra.mxu0 %v53
    %536 = vmatpush.msra.mxu0 %v52
    %537 = vmatpush.msra.mxu0 %v51
    %538 = vmatpush.msra.mxu0 %v50
    %539 = vmatmul.f32.gmra.mxu0 %v449
    %v540 = vpop.f32.mrf.mxu0
    %v541 = vadd.f32 %v521, %v540
    %542 = vdwg.mxu0
    %543 = vmatpush.msra.mxu0 %v81
    %544 = vmatpush.msra.mxu0 %v80
    %545 = vmatpush.msra.mxu0 %v79
    %546 = vmatpush.msra.mxu0 %v78
    %547 = vmatpush.msra.mxu0 %v77
    %548 = vmatpush.msra.mxu0 %v76
    %549 = vmatpush.msra.mxu0 %v75
    %550 = vmatpush.msra.mxu0 %v74
    %551 = vmatpush.msra.mxu0 %v73
    %552 = vmatpush.msra.mxu0 %v72
    %553 = vmatpush.msra.mxu0 %v71
    %554 = vmatpush.msra.mxu0 %v70
    %555 = vmatpush.msra.mxu0 %v69
    %556 = vmatpush.msra.mxu0 %v68
    %557 = vmatpush.msra.mxu0 %v67
    %558 = vmatpush.msra.mxu0 %v66
    %559 = vmatmul.f32.gmra.mxu0 %v450
    %v560 = vpop.f32.mrf.mxu0
    %v561 = vadd.f32 %v541, %v560
    %562 = vdwg.mxu0
    %563 = vmatpush.msra.mxu0 %v97
    %564 = vmatpush.msra.mxu0 %v96
    %565 = vmatpush.msra.mxu0 %v95
    %566 = vmatpush.msra.mxu0 %v94
    %567 = vmatpush.msra.mxu0 %v93
    %568 = vmatpush.msra.mxu0 %v92
    %569 = vmatpush.msra.mxu0 %v91
    %570 = vmatpush.msra.mxu0 %v90
    %571 = vmatpush.msra.mxu0 %v89
    %572 = vmatpush.msra.mxu0 %v88
    %573 = vmatpush.msra.mxu0 %v87
    %574 = vmatpush.msra.mxu0 %v86
    %575 = vmatpush.msra.mxu0 %v85
    %576 = vmatpush.msra.mxu0 %v84
    %577 = vmatpush.msra.mxu0 %v83
    %578 = vmatpush.msra.mxu0 %v82
    %579 = vmatmul.f32.gmra.mxu0 %v451
    %v580 = vpop.f32.mrf.mxu0
    %v581 = vadd.f32 %v561, %v580
    %582 = vdwg.mxu0
    %583 = vmatpush.msra.mxu0 %v113
    %584 = vmatpush.msra.mxu0 %v112
    %585 = vmatpush.msra.mxu0 %v111
    %586 = vmatpush.msra.mxu0 %v110
    %587 = vmatpush.msra.mxu0 %v109
    %588 = vmatpush.msra.mxu0 %v108
    %589 = vmatpush.msra.mxu0 %v107
    %590 = vmatpush.msra.mxu0 %v106
    %591 = vmatpush.msra.mxu0 %v105
    %592 = vmatpush.msra.mxu0 %v104
    %593 = vmatpush.msra.mxu0 %v103
    %594 = vmatpush.msra.mxu0 %v102
    %595 = vmatpush.msra.mxu0 %v101
    %596 = vmatpush.msra.mxu0 %v100
    %597 = vmatpush.msra.mxu0 %v99
    %598 = vmatpush.msra.mxu0 %v98
    %599 = vmatmul.f32.gmra.mxu0 %v452
    %v600 = vpop.f32.mrf.mxu0
    %v601 = vadd.f32 %v581, %v600
    %602 = vdwg.mxu0
    %603 = vmatpush.msra.mxu0 %v129
    %604 = vmatpush.msra.mxu0 %v128
    %605 = vmatpush.msra.mxu0 %v127
    %606 = vmatpush.msra.mxu0 %v126
    %607 = vmatpush.msra.mxu0 %v125
    %608 = vmatpush.msra.mxu0 %v124
    %609 = vmatpush.msra.mxu0 %v123
    %610 = vmatpush.msra.mxu0 %v122
    %611 = vmatpush.msra.mxu0 %v121
    %612 = vmatpush.msra.mxu0 %v120
    %613 = vmatpush.msra.mxu0 %v119
    %614 = vmatpush.msra.mxu0 %v118
    %615 = vmatpush.msra.mxu0 %v117
    %616 = vmatpush.msra.mxu0 %v116
    %617 = vmatpush.msra.mxu0 %v115
    %618 = vmatpush.msra.mxu0 %v114
    %619 = vmatmul.f32.gmra.mxu0 %v453
    %v620 = vpop.f32.mrf.mxu0
    %v621 = vadd.f32 %v601, %v620
    %622 = vdwg.mxu0
    %623 = vmatpush.msra.mxu0 %v145
    %624 = vmatpush.msra.mxu0 %v144
    %625 = vmatpush.msra.mxu0 %v143
    %626 = vmatpush.msra.mxu0 %v142
    %627 = vmatpush.msra.mxu0 %v141
    %628 = vmatpush.msra.mxu0 %v140
    %629 = vmatpush.msra.mxu0 %v139
    %630 = vmatpush.msra.mxu0 %v138
    %631 = vmatpush.msra.mxu0 %v137
    %632 = vmatpush.msra.mxu0 %v136
    %633 = vmatpush.msra.mxu0 %v135
    %634 = vmatpush.msra.mxu0 %v134
    %635 = vmatpush.msra.mxu0 %v133
    %636 = vmatpush.msra.mxu0 %v132
    %637 = vmatpush.msra.mxu0 %v131
    %638 = vmatpush.msra.mxu0 %v130
    %639 = vmatmul.f32.gmra.mxu0 %v454
    %v640 = vpop.f32.mrf.mxu0
    %v641 = vadd.f32 %v621, %v640
    %642 = vdwg.mxu0
    %643 = vmatpush.msra.mxu0 %v161
    %644 = vmatpush.msra.mxu0 %v160
    %645 = vmatpush.msra.mxu0 %v159
    %646 = vmatpush.msra.mxu0 %v158
    %647 = vmatpush.msra.mxu0 %v157
    %648 = vmatpush.msra.mxu0 %v156
    %649 = vmatpush.msra.mxu0 %v155
    %650 = vmatpush.msra.mxu0 %v154
    %651 = vmatpush.msra.mxu0 %v153
    %652 = vmatpush.msra.mxu0 %v152
    %653 = vmatpush.msra.mxu0 %v151
    %654 = vmatpush.msra.mxu0 %v150
    %655 = vmatpush.msra.mxu0 %v149
    %656 = vmatpush.msra.mxu0 %v148
    %657 = vmatpush.msra.mxu0 %v147
    %658 = vmatpush.msra.mxu0 %v146
    %659 = vmatmul.f32.gmra.mxu0 %v455
    %v660 = vpop.f32.mrf.mxu0
    %v661 = vadd.f32 %v641, %v660
    %662 = vdwg.mxu0
    %663 = vmatpush.msra.mxu0 %v177
    %664 = vmatpush.msra.mxu0 %v176
    %665 = vmatpush.msra.mxu0 %v175
    %666 = vmatpush.msra.mxu0 %v174
    %667 = vmatpush.msra.mxu0 %v173
    %668 = vmatpush.msra.mxu0 %v172
    %669 = vmatpush.msra.mxu0 %v171
    %670 = vmatpush.msra.mxu0 %v170
    %671 = vmatpush.msra.mxu0 %v169
    %672 = vmatpush.msra.mxu0 %v168
    %673 = vmatpush.msra.mxu0 %v167
    %674 = vmatpush.msra.mxu0 %v166
    %675 = vmatpush.msra.mxu0 %v165
    %676 = vmatpush.msra.mxu0 %v164
    %677 = vmatpush.msra.mxu0 %v163
    %678 = vmatpush.msra.mxu0 %v162
    %679 = vmatmul.f32.gmra.mxu0 %v458
    %v680 = vpop.f32.mrf.mxu0
    %v681 = vadd.f32 %v661, %v680
    %682 = vdwg.mxu0
    %683 = vmatpush.msra.mxu0 %v193
    %684 = vmatpush.msra.mxu0 %v192
    %685 = vmatpush.msra.mxu0 %v191
    %686 = vmatpush.msra.mxu0 %v190
    %687 = vmatpush.msra.mxu0 %v189
    %688 = vmatpush.msra.mxu0 %v188
    %689 = vmatpush.msra.mxu0 %v187
    %690 = vmatpush.msra.mxu0 %v186
    %691 = vmatpush.msra.mxu0 %v185
    %692 = vmatpush.msra.mxu0 %v184
    %693 = vmatpush.msra.mxu0 %v183
    %694 = vmatpush.msra.mxu0 %v182
    %695 = vmatpush.msra.mxu0 %v181
    %696 = vmatpush.msra.mxu0 %v180
    %697 = vmatpush.msra.mxu0 %v179
    %698 = vmatpush.msra.mxu0 %v178
    %699 = vmatmul.f32.gmra.mxu0 %v459
    %v700 = vpop.f32.mrf.mxu0
    %v701 = vadd.f32 %v681, %v700
    %702 = vdwg.mxu0
    %703 = vmatpush.msra.mxu0 %v209
    %704 = vmatpush.msra.mxu0 %v208
    %705 = vmatpush.msra.mxu0 %v207
    %706 = vmatpush.msra.mxu0 %v206
    %707 = vmatpush.msra.mxu0 %v205
    %708 = vmatpush.msra.mxu0 %v204
    %709 = vmatpush.msra.mxu0 %v203
    %710 = vmatpush.msra.mxu0 %v202
    %711 = vmatpush.msra.mxu0 %v201
    %712 = vmatpush.msra.mxu0 %v200
    %713 = vmatpush.msra.mxu0 %v199
    %714 = vmatpush.msra.mxu0 %v198
    %715 = vmatpush.msra.mxu0 %v197
    %716 = vmatpush.msra.mxu0 %v196
    %717 = vmatpush.msra.mxu0 %v195
    %718 = vmatpush.msra.mxu0 %v194
    %719 = vmatmul.f32.gmra.mxu0 %v460
    %v720 = vpop.f32.mrf.mxu0
    %v721 = vadd.f32 %v701, %v720
    %722 = vdwg.mxu0
    %723 = vmatpush.msra.mxu0 %v225
    %724 = vmatpush.msra.mxu0 %v224
    %725 = vmatpush.msra.mxu0 %v223
    %726 = vmatpush.msra.mxu0 %v222
    %727 = vmatpush.msra.mxu0 %v221
    %728 = vmatpush.msra.mxu0 %v220
    %729 = vmatpush.msra.mxu0 %v219
    %730 = vmatpush.msra.mxu0 %v218
    %731 = vmatpush.msra.mxu0 %v217
    %732 = vmatpush.msra.mxu0 %v216
    %733 = vmatpush.msra.mxu0 %v215
    %734 = vmatpush.msra.mxu0 %v214
    %735 = vmatpush.msra.mxu0 %v213
    %736 = vmatpush.msra.mxu0 %v212
    %737 = vmatpush.msra.mxu0 %v211
    %738 = vmatpush.msra.mxu0 %v210
    %739 = vmatmul.f32.gmra.mxu0 %v461
    %v740 = vpop.f32.mrf.mxu0
    %v741 = vadd.f32 %v721, %v740
    %742 = vdwg.mxu0
    %743 = vmatpush.msra.mxu0 %v241
    %744 = vmatpush.msra.mxu0 %v240
    %745 = vmatpush.msra.mxu0 %v239
    %746 = vmatpush.msra.mxu0 %v238
    %747 = vmatpush.msra.mxu0 %v237
    %748 = vmatpush.msra.mxu0 %v236
    %749 = vmatpush.msra.mxu0 %v235
    %750 = vmatpush.msra.mxu0 %v234
    %751 = vmatpush.msra.mxu0 %v233
    %752 = vmatpush.msra.mxu0 %v232
    %753 = vmatpush.msra.mxu0 %v231
    %754 = vmatpush.msra.mxu0 %v230
    %755 = vmatpush.msra.mxu0 %v229
    %756 = vmatpush.msra.mxu0 %v228
    %757 = vmatpush.msra.mxu0 %v227
    %758 = vmatpush.msra.mxu0 %v226
    %759 = vmatmul.f32.gmra.mxu0 %v462
    %v760 = vpop.f32.mrf.mxu0
    %v761 = vadd.f32 %v741, %v760
    %762 = vdwg.mxu0
    %763 = vmatpush.msra.mxu0 %v257
    %764 = vmatpush.msra.mxu0 %v256
    %765 = vmatpush.msra.mxu0 %v255
    %766 = vmatpush.msra.mxu0 %v254
    %767 = vmatpush.msra.mxu0 %v253
    %768 = vmatpush.msra.mxu0 %v252
    %769 = vmatpush.msra.mxu0 %v251
    %770 = vmatpush.msra.mxu0 %v250
    %771 = vmatpush.msra.mxu0 %v249
    %772 = vmatpush.msra.mxu0 %v248
    %773 = vmatpush.msra.mxu0 %v247
    %774 = vmatpush.msra.mxu0 %v246
    %775 = vmatpush.msra.mxu0 %v245
    %776 = vmatpush.msra.mxu0 %v244
    %777 = vmatpush.msra.mxu0 %v243
    %778 = vmatpush.msra.mxu0 %v242
    %779 = vmatmul.f32.gmra.mxu0 %v463
    %v780 = vpop.f32.mrf.mxu0
    %v781 = vadd.f32 %v761, %v780
    %782 = vdwg.mxu0
    %783 = vmatpush.msra.mxu0 %v273
    %784 = vmatpush.msra.mxu0 %v272
    %785 = vmatpush.msra.mxu0 %v271
    %786 = vmatpush.msra.mxu0 %v270
    %787 = vmatpush.msra.mxu0 %v269
    %788 = vmatpush.msra.mxu0 %v268
    %789 = vmatpush.msra.mxu0 %v267
    %790 = vmatpush.msra.mxu0 %v266
    %791 = vmatpush.msra.mxu0 %v265
    %792 = vmatpush.msra.mxu0 %v264
    %793 = vmatpush.msra.mxu0 %v263
    %794 = vmatpush.msra.mxu0 %v262
    %795 = vmatpush.msra.mxu0 %v261
    %796 = vmatpush.msra.mxu0 %v260
    %797 = vmatpush.msra.mxu0 %v259
    %798 = vmatpush.msra.mxu0 %v258
    %799 = vmatmul.f32.gmra.mxu0 %v464
    %v800 = vpop.f32.mrf.mxu0
    %v801 = vadd.f32 %v781, %v800
    %802 = vdwg.mxu0
    %803 = vmatpush.msra.mxu0 %v289
    %804 = vmatpush.msra.mxu0 %v288
    %805 = vmatpush.msra.mxu0 %v287
    %806 = vmatpush.msra.mxu0 %v286
    %807 = vmatpush.msra.mxu0 %v285
    %808 = vmatpush.msra.mxu0 %v284
    %809 = vmatpush.msra.mxu0 %v283
    %810 = vmatpush.msra.mxu0 %v282
    %811 = vmatpush.msra.mxu0 %v281
    %812 = vmatpush.msra.mxu0 %v280
    %813 = vmatpush.msra.mxu0 %v279
    %814 = vmatpush.msra.mxu0 %v278
    %815 = vmatpush.msra.mxu0 %v277
    %816 = vmatpush.msra.mxu0 %v276
    %817 = vmatpush.msra.mxu0 %v275
    %818 = vmatpush.msra.mxu0 %v274
    %819 = vmatmul.f32.gmra.mxu0 %v465
    %v820 = vpop.f32.mrf.mxu0
    %v821 = vadd.f32 %v801, %v820
    %822 = vdwg.mxu0
    %823 = vmatpush.msra.mxu0 %v305
    %824 = vmatpush.msra.mxu0 %v304
    %825 = vmatpush.msra.mxu0 %v303
    %826 = vmatpush.msra.mxu0 %v302
    %827 = vmatpush.msra.mxu0 %v301
    %828 = vmatpush.msra.mxu0 %v300
    %829 = vmatpush.msra.mxu0 %v299
    %830 = vmatpush.msra.mxu0 %v298
    %831 = vmatpush.msra.mxu0 %v297
    %832 = vmatpush.msra.mxu0 %v296
    %833 = vmatpush.msra.mxu0 %v295
    %834 = vmatpush.msra.mxu0 %v294
    %835 = vmatpush.msra.mxu0 %v293
    %836 = vmatpush.msra.mxu0 %v292
    %837 = vmatpush.msra.mxu0 %v291
    %838 = vmatpush.msra.mxu0 %v290
    %839 = vmatmul.f32.gmra.mxu0 %v468
    %v840 = vpop.f32.mrf.mxu0
    %v841 = vadd.f32 %v821, %v840
    %842 = vdwg.mxu0
    %843 = vmatpush.msra.mxu0 %v321
    %844 = vmatpush.msra.mxu0 %v320
    %845 = vmatpush.msra.mxu0 %v319
    %846 = vmatpush.msra.mxu0 %v318
    %847 = vmatpush.msra.mxu0 %v317
    %848 = vmatpush.msra.mxu0 %v316
    %849 = vmatpush.msra.mxu0 %v315
    %850 = vmatpush.msra.mxu0 %v314
    %851 = vmatpush.msra.mxu0 %v313
    %852 = vmatpush.msra.mxu0 %v312
    %853 = vmatpush.msra.mxu0 %v311
    %854 = vmatpush.msra.mxu0 %v310
    %855 = vmatpush.msra.mxu0 %v309
    %856 = vmatpush.msra.mxu0 %v308
    %857 = vmatpush.msra.mxu0 %v307
    %858 = vmatpush.msra.mxu0 %v306
    %859 = vmatmul.f32.gmra.mxu0 %v469
    %v860 = vpop.f32.mrf.mxu0
    %v861 = vadd.f32 %v841, %v860
    %862 = vdwg.mxu0
    %863 = vmatpush.msra.mxu0 %v337
    %864 = vmatpush.msra.mxu0 %v336
    %865 = vmatpush.msra.mxu0 %v335
    %866 = vmatpush.msra.mxu0 %v334
    %867 = vmatpush.msra.mxu0 %v333
    %868 = vmatpush.msra.mxu0 %v332
    %869 = vmatpush.msra.mxu0 %v331
    %870 = vmatpush.msra.mxu0 %v330
    %871 = vmatpush.msra.mxu0 %v329
    %872 = vmatpush.msra.mxu0 %v328
    %873 = vmatpush.msra.mxu0 %v327
    %874 = vmatpush.msra.mxu0 %v326
    %875 = vmatpush.msra.mxu0 %v325
    %876 = vmatpush.msra.mxu0 %v324
    %877 = vmatpush.msra.mxu0 %v323
    %878 = vmatpush.msra.mxu0 %v322
    %879 = vmatmul.f32.gmra.mxu0 %v470
    %v880 = vpop.f32.mrf.mxu0
    %v881 = vadd.f32 %v861, %v880
    %882 = vdwg.mxu0
    %883 = vmatpush.msra.mxu0 %v353
    %884 = vmatpush.msra.mxu0 %v352
    %885 = vmatpush.msra.mxu0 %v351
    %886 = vmatpush.msra.mxu0 %v350
    %887 = vmatpush.msra.mxu0 %v349
    %888 = vmatpush.msra.mxu0 %v348
    %889 = vmatpush.msra.mxu0 %v347
    %890 = vmatpush.msra.mxu0 %v346
    %891 = vmatpush.msra.mxu0 %v345
    %892 = vmatpush.msra.mxu0 %v344
    %893 = vmatpush.msra.mxu0 %v343
    %894 = vmatpush.msra.mxu0 %v342
    %895 = vmatpush.msra.mxu0 %v341
    %896 = vmatpush.msra.mxu0 %v340
    %897 = vmatpush.msra.mxu0 %v339
    %898 = vmatpush.msra.mxu0 %v338
    %899 = vmatmul.f32.gmra.mxu0 %v471
    %v900 = vpop.f32.mrf.mxu0
    %v901 = vadd.f32 %v881, %v900
    %902 = vdwg.mxu0
    %903 = vmatpush.msra.mxu0 %v369
    %904 = vmatpush.msra.mxu0 %v368
    %905 = vmatpush.msra.mxu0 %v367
    %906 = vmatpush.msra.mxu0 %v366
    %907 = vmatpush.msra.mxu0 %v365
    %908 = vmatpush.msra.mxu0 %v364
    %909 = vmatpush.msra.mxu0 %v363
    %910 = vmatpush.msra.mxu0 %v362
    %911 = vmatpush.msra.mxu0 %v361
    %912 = vmatpush.msra.mxu0 %v360
    %913 = vmatpush.msra.mxu0 %v359
    %914 = vmatpush.msra.mxu0 %v358
    %915 = vmatpush.msra.mxu0 %v357
    %916 = vmatpush.msra.mxu0 %v356
    %917 = vmatpush.msra.mxu0 %v355
    %918 = vmatpush.msra.mxu0 %v354
    %919 = vmatmul.f32.gmra.mxu0 %v472
    %v920 = vpop.f32.mrf.mxu0
    %v921 = vadd.f32 %v901, %v920
    %922 = vdwg.mxu0
    %923 = vmatpush.msra.mxu0 %v385
    %924 = vmatpush.msra.mxu0 %v384
    %925 = vmatpush.msra.mxu0 %v383
    %926 = vmatpush.msra.mxu0 %v382
    %927 = vmatpush.msra.mxu0 %v381
    %928 = vmatpush.msra.mxu0 %v380
    %929 = vmatpush.msra.mxu0 %v379
    %930 = vmatpush.msra.mxu0 %v378
    %931 = vmatpush.msra.mxu0 %v377
    %932 = vmatpush.msra.mxu0 %v376
    %933 = vmatpush.msra.mxu0 %v375
    %934 = vmatpush.msra.mxu0 %v374
    %935 = vmatpush.msra.mxu0 %v373
    %936 = vmatpush.msra.mxu0 %v372
    %937 = vmatpush.msra.mxu0 %v371
    %938 = vmatpush.msra.mxu0 %v370
    %939 = vmatmul.f32.gmra.mxu0 %v473
    %v940 = vpop.f32.mrf.mxu0
    %v941 = vadd.f32 %v921, %v940
    %942 = vdwg.mxu0
    %943 = vmatpush.msra.mxu0 %v401
    %944 = vmatpush.msra.mxu0 %v400
    %945 = vmatpush.msra.mxu0 %v399
    %946 = vmatpush.msra.mxu0 %v398
    %947 = vmatpush.msra.mxu0 %v397
    %948 = vmatpush.msra.mxu0 %v396
    %949 = vmatpush.msra.mxu0 %v395
    %950 = vmatpush.msra.mxu0 %v394
    %951 = vmatpush.msra.mxu0 %v393
    %952 = vmatpush.msra.mxu0 %v392
    %953 = vmatpush.msra.mxu0 %v391
    %954 = vmatpush.msra.mxu0 %v390
    %955 = vmatpush.msra.mxu0 %v389
    %956 = vmatpush.msra.mxu0 %v388
    %957 = vmatpush.msra.mxu0 %v387
    %958 = vmatpush.msra.mxu0 %v386
    %959 = vmatmul.f32.gmra.mxu0 %v474
    %v960 = vpop.f32.mrf.mxu0
    %v961 = vadd.f32 %v941, %v960
    %962 = vdwg.mxu0
    %963 = vmatpush.msra.mxu0 %v417
    %964 = vmatpush.msra.mxu0 %v416
    %965 = vmatpush.msra.mxu0 %v415
    %966 = vmatpush.msra.mxu0 %v414
    %967 = vmatpush.msra.mxu0 %v413
    %968 = vmatpush.msra.mxu0 %v412
    %969 = vmatpush.msra.mxu0 %v411
    %970 = vmatpush.msra.mxu0 %v410
    %971 = vmatpush.msra.mxu0 %v409
    %972 = vmatpush.msra.mxu0 %v408
    %973 = vmatpush.msra.mxu0 %v407
    %974 = vmatpush.msra.mxu0 %v406
    %975 = vmatpush.msra.mxu0 %v405
    %976 = vmatpush.msra.mxu0 %v404
    %977 = vmatpush.msra.mxu0 %v403
    %978 = vmatpush.msra.mxu0 %v402
    %979 = vmatmul.f32.gmra.mxu0 %v475
    %v980 = vpop.f32.mrf.mxu0
    %v981 = vadd.f32 %v961, %v980
    %982 = vdwg.mxu0
    %983 = vmatpush.msra.mxu0 %v433
    %984 = vmatpush.msra.mxu0 %v432
    %985 = vmatpush.msra.mxu0 %v431
    %986 = vmatpush.msra.mxu0 %v430
    %987 = vmatpush.msra.mxu0 %v429
    %988 = vmatpush.msra.mxu0 %v428
    %989 = vmatpush.msra.mxu0 %v427
    %990 = vmatpush.msra.mxu0 %v426
    %991 = vmatpush.msra.mxu0 %v425
    %992 = vmatpush.msra.mxu0 %v424
    %993 = vmatpush.msra.mxu0 %v423
    %994 = vmatpush.msra.mxu0 %v422
    %995 = vmatpush.msra.mxu0 %v421
    %996 = vmatpush.msra.mxu0 %v420
    %997 = vmatpush.msra.mxu0 %v419
    %998 = vmatpush.msra.mxu0 %v418
    %999 = vmatmul.f32.gmra.mxu0 %v477
    %v1000 = vpop.f32.mrf.mxu0
    %v1001 = vadd.f32 %v981, %v1000
    %1002 = vdwg.mxu0
    %v1003 = vmax.f32 %v1001, 0.0
    %v1004 = vld [vmem:[%s3] sm:$0xff]
    %v1005 = vld [vmem:[%s3 + $0x8] sm:$0xff]
    %v1006 = vld [vmem:[%s3 + $0x10] sm:$0xff]
    %v1007 = vld [vmem:[%s3 + $0x18] sm:$0xff]
    %v1008 = vld [vmem:[%s3 + $0x20] sm:$0xff]
    %v1009 = vld [vmem:[%s3 + $0x28] sm:$0xff]
    %v1010 = vld [vmem:[%s3 + $0x30] sm:$0xff]
    %v1011 = vld [vmem:[%s3 + $0x38] sm:$0xff]
    %v1012 = vld [vmem:[%s3 + $0x40] sm:$0xff]
    %v1013 = vld [vmem:[%s3 + $0x48] sm:$0xff]
    %v1014 = vld [vmem:[%s3 + $0x50] sm:$0xff]
    %v1015 = vld [vmem:[%s3 + $0x58] sm:$0xff]
    %v1016 = vld [vmem:[%s3 + $0x60] sm:$0xff]
    %v1017 = vld [vmem:[%s3 + $0x68] sm:$0xff]
    %v1018 = vld [vmem:[%s3 + $0x70] sm:$0xff]
    %v1019 = vld [vmem:[%s3 + $0x78] sm:$0xff]
    %v1020 = vld [vmem:[%s4] sm:$0x1]
    %v1022 = vperm.slane %v1020, 0
    %1024 = vmatpush.msra.mxu0 %v1019
    %1025 = vmatpush.msra.mxu0 %v1018
    %1026 = vmatpush.msra.mxu0 %v1017
    %1027 = vmatpush.msra.mxu0 %v1016
    %1028 = vmatpush.msra.mxu0 %v1015
    %1029 = vmatpush.msra.mxu0 %v1014
    %1030 = vmatpush.msra.mxu0 %v1013
    %1031 = vmatpush.msra.mxu0 %v1012
    %1032 = vmatpush.msra.mxu0 %v1011
    %1033 = vmatpush.msra.mxu0 %v1010
    %1034 = vmatpush.msra.mxu0 %v1009
    %1035 = vmatpush.msra.mxu0 %v1008
    %1036 = vmatpush.msra.mxu0 %v1007
    %1037 = vmatpush.msra.mxu0 %v1006
    %1038 = vmatpush.msra.mxu0 %v1005
    %1039 = vmatpush.msra.mxu0 %v1004
    %1040 = vmatmul.f32.gmra.mxu0 %v1003
    %v1041 = vpop.f32.mrf.mxu0
    %v1042 = vadd.f32 %v1022, %v1041
    %1043 = vdwg.mxu0
    %v1044 = vmax.f32 %v1042, 0.0
    %v1045 = vld [vmem:[%s5] sm:$0xff]
    %v1046 = vld [vmem:[%s5 + $0x8] sm:$0xff]
    %v1047 = vld [vmem:[%s5 + $0x10] sm:$0xff]
    %v1048 = vld [vmem:[%s5 + $0x18] sm:$0xff]
    %v1049 = vld [vmem:[%s5 + $0x20] sm:$0xff]
    %v1050 = vld [vmem:[%s5 + $0x28] sm:$0xff]
    %v1051 = vld [vmem:[%s5 + $0x30] sm:$0xff]
    %v1052 = vld [vmem:[%s5 + $0x38] sm:$0xff]
    %v1053 = vld [vmem:[%s5 + $0x40] sm:$0xff]
    %v1054 = vld [vmem:[%s5 + $0x48] sm:$0xff]
    %v1055 = vld [vmem:[%s5 + $0x50] sm:$0xff]
    %v1056 = vld [vmem:[%s5 + $0x58] sm:$0xff]
    %v1057 = vld [vmem:[%s5 + $0x60] sm:$0xff]
    %v1058 = vld [vmem:[%s5 + $0x68] sm:$0xff]
    %v1059 = vld [vmem:[%s5 + $0x70] sm:$0xff]
    %v1060 = vld [vmem:[%s5 + $0x78] sm:$0xff]
    %v1061 = vld [vmem:[%s6] sm:$0x1]
    %v1063 = vperm.slane %v1061, 0
    %1065 = vmatpush.msra.mxu0 %v1060
    %1066 = vmatpush.msra.mxu0 %v1059
    %1067 = vmatpush.msra.mxu0 %v1058
    %1068 = vmatpush.msra.mxu0 %v1057
    %1069 = vmatpush.msra.mxu0 %v1056
    %1070 = vmatpush.msra.mxu0 %v1055
    %1071 = vmatpush.msra.mxu0 %v1054
    %1072 = vmatpush.msra.mxu0 %v1053
    %1073 = vmatpush.msra.mxu0 %v1052
    %1074 = vmatpush.msra.mxu0 %v1051
    %1075 = vmatpush.msra.mxu0 %v1050
    %1076 = vmatpush.msra.mxu0 %v1049
    %1077 = vmatpush.msra.mxu0 %v1048
    %1078 = vmatpush.msra.mxu0 %v1047
    %1079 = vmatpush.msra.mxu0 %v1046
    %1080 = vmatpush.msra.mxu0 %v1045
    %1081 = vmatmul.f32.gmra.mxu0 %v1044
    %v1082 = vpop.f32.mrf.mxu0
    %v1083 = vadd.f32 %v1063, %v1082
    %1084 = vdwg.mxu0
    %1085 = vst [vmem:[#allocation2] sm:$0x3] %v1083
    // Predicated region
    $region30: #{net_forward.5} parent=1 // pred_check
      _
    $region31: #{net_forward.5} parent=1 // pred_check_branch
      %1087 = sbr.rel (0) target = $region33
    $region32: #{net_forward.5} parent=1 // pred_region
      %1089 = vsyncadd [#allocation3], 0
      %s1091 = sshll.u32 [#allocation2], 4
      %s1092 = int_to_ptr.vmem [resolvable:$true] %s1091
      %s1093 = sshll.u32 %s7, 4
      %s1094 = int_to_ptr.hbm [resolvable:$true] %s1093
      %1096 = dma.vmem_to_hbm [thread:$0]  %s1092, 32, %s1094, [#allocation3]
    $region33: #{net_forward.5} parent=1 // pred_fallthru
      _
    // Predicated region
    $region34: #{net_forward.5} parent=1 // pred_check
      _
    $region35: #{net_forward.5} parent=1 // pred_check_branch
      %1098 = sbr.rel (0) target = $region37
    $region36: #{net_forward.5} parent=1 // pred_region
      %1100 = dma.done [#allocation3], 32
    $region37: #{net_forward.5} parent=1 // pred_fallthru
      _
    %1101 = vsyncpa [#allocation3], 1

</llo_original>
